<compile_context>
chip_gen: v7x
topology: tpu7x:2x2x1
jax: 0.10.0
libtpu: 0.0.40
codegen_flags: <defaults>
</compile_context>

<pallas_src>
import functools
import math

import jax
import jax.numpy as jnp
from jax.experimental import pallas as pl
from jax.experimental.pallas import tpu as pltpu

LANES = 128  # particle axis N maps onto the 128 vector lanes


def _make_sis_kernel(T1: int, B: int, N: int, D: int, E: int, sigma2: float):
    log_n = math.log(float(N))
    gauss_const = -0.5 * E * math.log(2.0 * math.pi * sigma2)
    neg_half_inv_var = -0.5 / sigma2

    def kernel(obs_ref, noise_ref, w_ref, out_ref):
        # obs_ref   : (T1, B, E, N)   observations, pre-broadcast along lanes
        # noise_ref : (T1, B, D, N)   pre-drawn proposal noise (t = 0 = initial draw)
        # w_ref     : (D, D+E, N)     fused lane-broadcast weights [A | H]
        # out_ref   : (T1, B, LANES)  packed: lanes [0:D) mean, [D:2D) log-lik, rest 0
        W = w_ref[...]                                         # kept resident, 64 KB
        pad = jnp.zeros((B, LANES - 2 * D), jnp.float32)       # hoisted output padding

        def contract(state):
            # (B, D, N) x (D, D+E, N) -> (B, D+E, N):
            #   out[b, j, n] = sum_d state[b, d, n] * W[d, j]
            # D unrolled broadcast-multiply-adds on the VPU (exact f32, no MXU).
            # One fused pass yields BOTH x_t @ A (next-step drift) and x_t @ H (pred),
            # halving the per-d sublane broadcasts of state[:, d, :].
            acc = state[:, 0:1, :] * W[0:1]
            for d in range(1, D):
                acc = acc + state[:, d:d + 1, :] * W[d:d + 1]
            return acc

        a_state = None     # x_t @ A, carried to step t+1
        logw = None        # (B, N) normalised log-weight carry

        # Fully unrolled time loop (static trip count T1): single invocation, the LLO
        # scheduler sees every step, and the output is DMA'd to HBM exactly once.
        for t in range(T1):
            # initial proposal x_0 ~ N(0, I)  /  bootstrap dynamics x_t = x_{t-1} A + eps_t
            state = noise_ref[0] if t == 0 else a_state + noise_ref[t]

            both = contract(state)                             # (B, D+E, N)
            a_state = both[:, :D, :]                           # drift for next step
            pred = both[:, D:, :]                              # x_t @ H, (B, E, N)

            # Observation log-density  log N(y_t | x_t H, sigma2 I)   (matches reference)
            diff = pred - obs_ref[t]
            loglik = neg_half_inv_var * jnp.sum(diff * diff, axis=1) + gauss_const

            # Importance-weight update + exact logsumexp normalisation over particles.
            logw_unnorm = loglik if t == 0 else logw + loglik
            m = jnp.max(logw_unnorm, axis=-1, keepdims=True)              # (B, 1)
            s = jnp.sum(jnp.exp(logw_unnorm - m), axis=-1, keepdims=True)  # (B, 1)
            lse = m + jnp.log(s)
            logw = logw_unnorm - lse
            w = jnp.exp(logw)                                              # (B, N)

            # Aggregation: filtering mean; likelihood -= log(N)  (as SIS.forward does).
            mean = jnp.sum(w[:, None, :] * state, axis=-1)                 # (B, D)
            lik = jnp.broadcast_to(lse - log_n, (B, D))                    # (B, D)
            # One full-width (B, 128) row per step -> unmasked lane-dense stores.
            out_ref[t] = jnp.concatenate([mean, lik, pad], axis=-1)

    return kernel


def sis_filter(observation, noise, A, H, *, sigma2):
    """Fused bootstrap-SIS filter.  Returns (filtering_means, log_likelihoods)."""
    T1, B, E = observation.shape
    _, _, D, N = noise.shape
    assert N == LANES, "particle count must equal the 128-lane width"
    assert 2 * D <= LANES, "mean + log-lik must fit in one 128-lane output row"

    # Layout plumbing, done once outside the kernel (not compute hoisting):
    #  * noise already arrives in the lane-dense (T1, B, D, N) layout -> no transpose;
    #  * observation is lane-broadcast so the kernel never sees a lane-1 operand;
    #  * A and H are fused into a single lane-broadcast weight slab [A | H].
    obs_bc = jnp.broadcast_to(observation[..., None], (T1, B, E, N))
    W = jnp.broadcast_to(jnp.concatenate([A, H], axis=1)[:, :, None], (D, D + E, N))

    kernel = _make_sis_kernel(T1, B, N, D, E, sigma2)
    packed = pl.pallas_call(
        kernel,
        grid=(1,),                                             # single invocation
        in_specs=[
            pl.BlockSpec((T1, B, E, N), lambda i: (0, 0, 0, 0)),
            pl.BlockSpec((T1, B, D, N), lambda i: (0, 0, 0, 0)),
            pl.BlockSpec((D, D + E, N), lambda i: (0, 0, 0)),
        ],
        out_specs=pl.BlockSpec((T1, B, LANES), lambda i: (0, 0, 0)),
        out_shape=jax.ShapeDtypeStruct((T1, B, LANES), jnp.float32),
        compiler_params=pltpu.CompilerParams(
            dimension_semantics=("arbitrary",)),
    )(obs_bc, noise, W)

    means = packed[..., :D]           # (T1, B, D)
    liks = packed[..., D:D + 1]       # (T1, B, 1)
    return means, liks


def sis_reference(observation, noise, A, H, sigma2):
    """Pure-JAX reference replicating SIS.forward for this instantiation."""
    T1, B, E = observation.shape
    D, N = noise.shape[2], noise.shape[3]
    noise_bnd = jnp.transpose(noise, (0, 1, 3, 2))             # (T1, B, N, D)
    log_n = math.log(float(N))
    const = -0.5 * E * math.log(2.0 * math.pi * sigma2)
    HI = jax.lax.Precision.HIGHEST

    def obs_loglik(state, y):
        pred = jnp.einsum('bnd,de->bne', state, H, precision=HI)
        diff = pred - y[:, None, :]
        return -0.5 / sigma2 * jnp.sum(diff * diff, axis=-1) + const

    means, liks = [], []
    state = noise_bnd[0]
    logw = jnp.zeros((B, N), jnp.float32)
    for t in range(T1):
        if t > 0:
            state = jnp.einsum('bnd,de->bne', state, A, precision=HI) + noise_bnd[t]
        logw_unnorm = logw + obs_loglik(state, observation[t])
        m = jnp.max(logw_unnorm, axis=-1, keepdims=True)
        s = jnp.sum(jnp.exp(logw_unnorm - m), axis=-1, keepdims=True)
        lse = m + jnp.log(s)
        logw = logw_unnorm - lse
        w = jnp.exp(logw)
        means.append(jnp.sum(w[:, :, None] * state, axis=1))
        liks.append(lse - log_n)
    return jnp.stack(means), jnp.stack(liks)


if __name__ == "__main__":
    # Small, module-consistent shapes: batch=2, particles=128, state dim=8,
    # obs dim=8, time_extent=7 (i.e. 8 importance-sampling populations).
    B, N, D, E = 2, 128, 8, 8
    time_extent = 7
    T1 = time_extent + 1
    sigma2 = 2.0

    key = jax.random.PRNGKey(0)
    k_obs, k_noise = jax.random.split(key)
    observation = jax.random.normal(k_obs, (T1, B, E), dtype=jnp.float32)
    # Pre-drawn proposal noise, generated directly in the kernel's lane-dense
    # (T1, B, D, N) layout (the t = 0 slice doubles as the initial particle draw).
    noise = jax.random.normal(k_noise, (T1, B, D, N), dtype=jnp.float32)

    # Deterministic model parameters (synthetic; no checkpoint load).
    A = (0.7 * jnp.eye(D, dtype=jnp.float32)
         + 0.1 * jnp.roll(jnp.eye(D, dtype=jnp.float32), 1, axis=1))
    H = jnp.eye(D, E, dtype=jnp.float32)

    run = jax.jit(functools.partial(sis_filter, sigma2=sigma2))
    means, liks = run(observation, noise, A, H)
    jax.block_until_ready((means, liks))

    ref_means, ref_liks = sis_reference(observation, noise, A, H, sigma2)
    assert means.shape == (T1, B, D) and liks.shape == (T1, B, 1)
    assert bool(jnp.all(jnp.isfinite(means))) and bool(jnp.all(jnp.isfinite(liks)))
    assert jnp.allclose(means, ref_means, atol=2e-3, rtol=2e-3), (
        "max |mean diff| = %g" % float(jnp.max(jnp.abs(means - ref_means))))
    assert jnp.allclose(liks, ref_liks, atol=2e-3, rtol=2e-3), (
        "max |lik diff| = %g" % float(jnp.max(jnp.abs(liks - ref_liks))))

    print("KERNEL_OK")
</pallas_src>

<mosaic_0001>
module attributes {stable_mosaic.version = 11 : i64} {
  func.func @kernel(%arg0: i32, %arg1: memref<8x2x8x128xf32, #tpu.memory_space<vmem>>, %arg2: memref<8x2x8x128xf32, #tpu.memory_space<vmem>>, %arg3: memref<8x16x128xf32, #tpu.memory_space<vmem>>, %arg4: memref<8x2x128xf32, #tpu.memory_space<vmem>>) attributes {dimension_semantics = [#tpu.dimension_semantics<arbitrary>], iteration_bounds = array<i64: 1>, scalar_prefetch = 0 : i64, scratch_operands = 0 : i64, tpu.core_type = #tpu.core_type<tc>, window_params = [{pipeline_mode = #tpu.pipeline_mode<synchronous>, transform_indices = @transform_0, window_bounds = array<i64: 8, 2, 8, 128>}, {pipeline_mode = #tpu.pipeline_mode<synchronous>, transform_indices = @transform_1, window_bounds = array<i64: 8, 2, 8, 128>}, {pipeline_mode = #tpu.pipeline_mode<synchronous>, transform_indices = @transform_2, window_bounds = array<i64: 8, 16, 128>}, {pipeline_mode = #tpu.pipeline_mode<synchronous>, transform_indices = @transform_3, window_bounds = array<i64: 8, 2, 128>}]} {
    %c0 = arith.constant 0 : index
    %c0_0 = arith.constant 0 : index
    %c0_1 = arith.constant 0 : index
    %0 = vector.load %arg3[%c0, %c0_0, %c0_1] : memref<8x16x128xf32, #tpu.memory_space<vmem>>, vector<8x16x128xf32>
    %cst = arith.constant 0.000000e+00 : f32
    %1 = vector.broadcast %cst : f32 to vector<2x112xf32>
    %c0_2 = arith.constant 0 : index
    %c0_3 = arith.constant 0 : index
    %c0_4 = arith.constant 0 : index
    %c0_5 = arith.constant 0 : index
    %2 = vector.load %arg2[%c0_2, %c0_3, %c0_4, %c0_5] : memref<8x2x8x128xf32, #tpu.memory_space<vmem>>, vector<1x2x8x128xf32>
    %3 = vector.shape_cast %2 : vector<1x2x8x128xf32> to vector<2x8x128xf32>
    %4 = vector.extract_strided_slice %3 {offsets = [0, 0, 0], sizes = [2, 1, 128], strides = [1, 1, 1]} : vector<2x8x128xf32> to vector<2x1x128xf32>
    %5 = vector.extract_strided_slice %0 {offsets = [0, 0, 0], sizes = [1, 16, 128], strides = [1, 1, 1]} : vector<8x16x128xf32> to vector<1x16x128xf32>
    %6 = vector.broadcast %4 : vector<2x1x128xf32> to vector<2x16x128xf32>
    %7 = vector.broadcast %5 : vector<1x16x128xf32> to vector<2x16x128xf32>
    %8 = arith.mulf %6, %7 : vector<2x16x128xf32>
    %9 = vector.extract_strided_slice %3 {offsets = [0, 1, 0], sizes = [2, 1, 128], strides = [1, 1, 1]} : vector<2x8x128xf32> to vector<2x1x128xf32>
    %10 = vector.extract_strided_slice %0 {offsets = [1, 0, 0], sizes = [1, 16, 128], strides = [1, 1, 1]} : vector<8x16x128xf32> to vector<1x16x128xf32>
    %11 = vector.broadcast %9 : vector<2x1x128xf32> to vector<2x16x128xf32>
    %12 = vector.broadcast %10 : vector<1x16x128xf32> to vector<2x16x128xf32>
    %13 = arith.mulf %11, %12 : vector<2x16x128xf32>
    %14 = arith.addf %8, %13 : vector<2x16x128xf32>
    %15 = vector.extract_strided_slice %3 {offsets = [0, 2, 0], sizes = [2, 1, 128], strides = [1, 1, 1]} : vector<2x8x128xf32> to vector<2x1x128xf32>
    %16 = vector.extract_strided_slice %0 {offsets = [2, 0, 0], sizes = [1, 16, 128], strides = [1, 1, 1]} : vector<8x16x128xf32> to vector<1x16x128xf32>
    %17 = vector.broadcast %15 : vector<2x1x128xf32> to vector<2x16x128xf32>
    %18 = vector.broadcast %16 : vector<1x16x128xf32> to vector<2x16x128xf32>
    %19 = arith.mulf %17, %18 : vector<2x16x128xf32>
    %20 = arith.addf %14, %19 : vector<2x16x128xf32>
    %21 = vector.extract_strided_slice %3 {offsets = [0, 3, 0], sizes = [2, 1, 128], strides = [1, 1, 1]} : vector<2x8x128xf32> to vector<2x1x128xf32>
    %22 = vector.extract_strided_slice %0 {offsets = [3, 0, 0], sizes = [1, 16, 128], strides = [1, 1, 1]} : vector<8x16x128xf32> to vector<1x16x128xf32>
    %23 = vector.broadcast %21 : vector<2x1x128xf32> to vector<2x16x128xf32>
    %24 = vector.broadcast %22 : vector<1x16x128xf32> to vector<2x16x128xf32>
    %25 = arith.mulf %23, %24 : vector<2x16x128xf32>
    %26 = arith.addf %20, %25 : vector<2x16x128xf32>
    %27 = vector.extract_strided_slice %3 {offsets = [0, 4, 0], sizes = [2, 1, 128], strides = [1, 1, 1]} : vector<2x8x128xf32> to vector<2x1x128xf32>
    %28 = vector.extract_strided_slice %0 {offsets = [4, 0, 0], sizes = [1, 16, 128], strides = [1, 1, 1]} : vector<8x16x128xf32> to vector<1x16x128xf32>
    %29 = vector.broadcast %27 : vector<2x1x128xf32> to vector<2x16x128xf32>
    %30 = vector.broadcast %28 : vector<1x16x128xf32> to vector<2x16x128xf32>
    %31 = arith.mulf %29, %30 : vector<2x16x128xf32>
    %32 = arith.addf %26, %31 : vector<2x16x128xf32>
    %33 = vector.extract_strided_slice %3 {offsets = [0, 5, 0], sizes = [2, 1, 128], strides = [1, 1, 1]} : vector<2x8x128xf32> to vector<2x1x128xf32>
    %34 = vector.extract_strided_slice %0 {offsets = [5, 0, 0], sizes = [1, 16, 128], strides = [1, 1, 1]} : vector<8x16x128xf32> to vector<1x16x128xf32>
    %35 = vector.broadcast %33 : vector<2x1x128xf32> to vector<2x16x128xf32>
    %36 = vector.broadcast %34 : vector<1x16x128xf32> to vector<2x16x128xf32>
    %37 = arith.mulf %35, %36 : vector<2x16x128xf32>
    %38 = arith.addf %32, %37 : vector<2x16x128xf32>
    %39 = vector.extract_strided_slice %3 {offsets = [0, 6, 0], sizes = [2, 1, 128], strides = [1, 1, 1]} : vector<2x8x128xf32> to vector<2x1x128xf32>
    %40 = vector.extract_strided_slice %0 {offsets = [6, 0, 0], sizes = [1, 16, 128], strides = [1, 1, 1]} : vector<8x16x128xf32> to vector<1x16x128xf32>
    %41 = vector.broadcast %39 : vector<2x1x128xf32> to vector<2x16x128xf32>
    %42 = vector.broadcast %40 : vector<1x16x128xf32> to vector<2x16x128xf32>
    %43 = arith.mulf %41, %42 : vector<2x16x128xf32>
    %44 = arith.addf %38, %43 : vector<2x16x128xf32>
    %45 = vector.extract_strided_slice %3 {offsets = [0, 7, 0], sizes = [2, 1, 128], strides = [1, 1, 1]} : vector<2x8x128xf32> to vector<2x1x128xf32>
    %46 = vector.extract_strided_slice %0 {offsets = [7, 0, 0], sizes = [1, 16, 128], strides = [1, 1, 1]} : vector<8x16x128xf32> to vector<1x16x128xf32>
    %47 = vector.broadcast %45 : vector<2x1x128xf32> to vector<2x16x128xf32>
    %48 = vector.broadcast %46 : vector<1x16x128xf32> to vector<2x16x128xf32>
    %49 = arith.mulf %47, %48 : vector<2x16x128xf32>
    %50 = arith.addf %44, %49 : vector<2x16x128xf32>
    %51 = vector.extract_strided_slice %50 {offsets = [0, 0, 0], sizes = [2, 8, 128], strides = [1, 1, 1]} : vector<2x16x128xf32> to vector<2x8x128xf32>
    %52 = vector.extract_strided_slice %50 {offsets = [0, 8, 0], sizes = [2, 8, 128], strides = [1, 1, 1]} : vector<2x16x128xf32> to vector<2x8x128xf32>
    %c0_6 = arith.constant 0 : index
    %c0_7 = arith.constant 0 : index
    %c0_8 = arith.constant 0 : index
    %c0_9 = arith.constant 0 : index
    %53 = vector.load %arg1[%c0_6, %c0_7, %c0_8, %c0_9] : memref<8x2x8x128xf32, #tpu.memory_space<vmem>>, vector<1x2x8x128xf32>
    %54 = vector.shape_cast %53 : vector<1x2x8x128xf32> to vector<2x8x128xf32>
    %55 = arith.subf %52, %54 : vector<2x8x128xf32>
    %56 = arith.mulf %55, %55 : vector<2x8x128xf32>
    %cst_10 = arith.constant dense<0.000000e+00> : vector<2x128xf32>
    %57 = vector.multi_reduction <add>, %56, %cst_10 [1] : vector<2x8x128xf32> to vector<2x128xf32>
    %cst_11 = arith.constant -2.500000e-01 : f32
    %58 = vector.broadcast %cst_11 : f32 to vector<2x128xf32>
    %59 = arith.mulf %58, %57 : vector<2x128xf32>
    %cst_12 = arith.constant -10.1240969 : f32
    %60 = vector.broadcast %cst_12 : f32 to vector<2x128xf32>
    %61 = arith.addf %59, %60 : vector<2x128xf32>
    %cst_13 = arith.constant dense<0xFF800000> : vector<2xf32>
    %62 = vector.multi_reduction <maximumf>, %61, %cst_13 [1] : vector<2x128xf32> to vector<2xf32>
    %63 = vector.shape_cast %62 : vector<2xf32> to vector<2x1xf32>
    %64 = vector.broadcast %63 : vector<2x1xf32> to vector<2x128xf32>
    %65 = arith.subf %61, %64 : vector<2x128xf32>
    %66 = math.exp %65 : vector<2x128xf32>
    %cst_14 = arith.constant dense<0.000000e+00> : vector<2xf32>
    %67 = vector.multi_reduction <add>, %66, %cst_14 [1] : vector<2x128xf32> to vector<2xf32>
    %68 = vector.shape_cast %67 : vector<2xf32> to vector<2x1xf32>
    %69 = math.log %68 : vector<2x1xf32>
    %70 = arith.addf %63, %69 : vector<2x1xf32>
    %71 = vector.broadcast %70 : vector<2x1xf32> to vector<2x128xf32>
    %72 = arith.subf %61, %71 : vector<2x128xf32>
    %73 = math.exp %72 : vector<2x128xf32>
    %74 = vector.shape_cast %73 : vector<2x128xf32> to vector<2x1x128xf32>
    %75 = vector.broadcast %74 : vector<2x1x128xf32> to vector<2x8x128xf32>
    %76 = arith.mulf %75, %3 : vector<2x8x128xf32>
    %cst_15 = arith.constant dense<0.000000e+00> : vector<2x8xf32>
    %77 = vector.multi_reduction <add>, %76, %cst_15 [2] : vector<2x8x128xf32> to vector<2x8xf32>
    %cst_16 = arith.constant 4.85203028 : f32
    %78 = vector.broadcast %cst_16 : f32 to vector<2x1xf32>
    %79 = arith.subf %70, %78 : vector<2x1xf32>
    %80 = vector.shape_cast %79 : vector<2x1xf32> to vector<2x1xf32>
    %81 = vector.broadcast %80 : vector<2x1xf32> to vector<2x8xf32>
    %82 = tpu.concatenate %77, %81, %1 in 1 : vector<2x8xf32>, vector<2x8xf32>, vector<2x112xf32> -> vector<2x128xf32>
    %c0_17 = arith.constant 0 : index
    %c0_18 = arith.constant 0 : index
    %c0_19 = arith.constant 0 : index
    %83 = vector.load %arg4[%c0_17, %c0_18, %c0_19] : memref<8x2x128xf32, #tpu.memory_space<vmem>>, vector<1x2x128xf32>
    %84 = vector.shape_cast %83 : vector<1x2x128xf32> to vector<2x128xf32>
    %85 = vector.shape_cast %82 : vector<2x128xf32> to vector<1x2x128xf32>
    tpu.vector_store %arg4[%c0_17, %c0_18, %c0_19], %85 {strides = array<i32>} : memref<8x2x128xf32, #tpu.memory_space<vmem>>, vector<1x2x128xf32>,
    %c1 = arith.constant 1 : index
    %c0_20 = arith.constant 0 : index
    %c0_21 = arith.constant 0 : index
    %c0_22 = arith.constant 0 : index
    %86 = vector.load %arg2[%c1, %c0_20, %c0_21, %c0_22] : memref<8x2x8x128xf32, #tpu.memory_space<vmem>>, vector<1x2x8x128xf32>
    %87 = vector.shape_cast %86 : vector<1x2x8x128xf32> to vector<2x8x128xf32>
    %88 = arith.addf %51, %87 : vector<2x8x128xf32>
    %89 = vector.extract_strided_slice %88 {offsets = [0, 0, 0], sizes = [2, 1, 128], strides = [1, 1, 1]} : vector<2x8x128xf32> to vector<2x1x128xf32>
    %90 = vector.extract_strided_slice %0 {offsets = [0, 0, 0], sizes = [1, 16, 128], strides = [1, 1, 1]} : vector<8x16x128xf32> to vector<1x16x128xf32>
    %91 = vector.broadcast %89 : vector<2x1x128xf32> to vector<2x16x128xf32>
    %92 = vector.broadcast %90 : vector<1x16x128xf32> to vector<2x16x128xf32>
    %93 = arith.mulf %91, %92 : vector<2x16x128xf32>
    %94 = vector.extract_strided_slice %88 {offsets = [0, 1, 0], sizes = [2, 1, 128], strides = [1, 1, 1]} : vector<2x8x128xf32> to vector<2x1x128xf32>
    %95 = vector.extract_strided_slice %0 {offsets = [1, 0, 0], sizes = [1, 16, 128], strides = [1, 1, 1]} : vector<8x16x128xf32> to vector<1x16x128xf32>
    %96 = vector.broadcast %94 : vector<2x1x128xf32> to vector<2x16x128xf32>
    %97 = vector.broadcast %95 : vector<1x16x128xf32> to vector<2x16x128xf32>
    %98 = arith.mulf %96, %97 : vector<2x16x128xf32>
    %99 = arith.addf %93, %98 : vector<2x16x128xf32>
    %100 = vector.extract_strided_slice %88 {offsets = [0, 2, 0], sizes = [2, 1, 128], strides = [1, 1, 1]} : vector<2x8x128xf32> to vector<2x1x128xf32>
    %101 = vector.extract_strided_slice %0 {offsets = [2, 0, 0], sizes = [1, 16, 128], strides = [1, 1, 1]} : vector<8x16x128xf32> to vector<1x16x128xf32>
    %102 = vector.broadcast %100 : vector<2x1x128xf32> to vector<2x16x128xf32>
    %103 = vector.broadcast %101 : vector<1x16x128xf32> to vector<2x16x128xf32>
    %104 = arith.mulf %102, %103 : vector<2x16x128xf32>
    %105 = arith.addf %99, %104 : vector<2x16x128xf32>
    %106 = vector.extract_strided_slice %88 {offsets = [0, 3, 0], sizes = [2, 1, 128], strides = [1, 1, 1]} : vector<2x8x128xf32> to vector<2x1x128xf32>
    %107 = vector.extract_strided_slice %0 {offsets = [3, 0, 0], sizes = [1, 16, 128], strides = [1, 1, 1]} : vector<8x16x128xf32> to vector<1x16x128xf32>
    %108 = vector.broadcast %106 : vector<2x1x128xf32> to vector<2x16x128xf32>
    %109 = vector.broadcast %107 : vector<1x16x128xf32> to vector<2x16x128xf32>
    %110 = arith.mulf %108, %109 : vector<2x16x128xf32>
    %111 = arith.addf %105, %110 : vector<2x16x128xf32>
    %112 = vector.extract_strided_slice %88 {offsets = [0, 4, 0], sizes = [2, 1, 128], strides = [1, 1, 1]} : vector<2x8x128xf32> to vector<2x1x128xf32>
    %113 = vector.extract_strided_slice %0 {offsets = [4, 0, 0], sizes = [1, 16, 128], strides = [1, 1, 1]} : vector<8x16x128xf32> to vector<1x16x128xf32>
    %114 = vector.broadcast %112 : vector<2x1x128xf32> to vector<2x16x128xf32>
    %115 = vector.broadcast %113 : vector<1x16x128xf32> to vector<2x16x128xf32>
    %116 = arith.mulf %114, %115 : vector<2x16x128xf32>
    %117 = arith.addf %111, %116 : vector<2x16x128xf32>
    %118 = vector.extract_strided_slice %88 {offsets = [0, 5, 0], sizes = [2, 1, 128], strides = [1, 1, 1]} : vector<2x8x128xf32> to vector<2x1x128xf32>
    %119 = vector.extract_strided_slice %0 {offsets = [5, 0, 0], sizes = [1, 16, 128], strides = [1, 1, 1]} : vector<8x16x128xf32> to vector<1x16x128xf32>
    %120 = vector.broadcast %118 : vector<2x1x128xf32> to vector<2x16x128xf32>
    %121 = vector.broadcast %119 : vector<1x16x128xf32> to vector<2x16x128xf32>
    %122 = arith.mulf %120, %121 : vector<2x16x128xf32>
    %123 = arith.addf %117, %122 : vector<2x16x128xf32>
    %124 = vector.extract_strided_slice %88 {offsets = [0, 6, 0], sizes = [2, 1, 128], strides = [1, 1, 1]} : vector<2x8x128xf32> to vector<2x1x128xf32>
    %125 = vector.extract_strided_slice %0 {offsets = [6, 0, 0], sizes = [1, 16, 128], strides = [1, 1, 1]} : vector<8x16x128xf32> to vector<1x16x128xf32>
    %126 = vector.broadcast %124 : vector<2x1x128xf32> to vector<2x16x128xf32>
    %127 = vector.broadcast %125 : vector<1x16x128xf32> to vector<2x16x128xf32>
    %128 = arith.mulf %126, %127 : vector<2x16x128xf32>
    %129 = arith.addf %123, %128 : vector<2x16x128xf32>
    %130 = vector.extract_strided_slice %88 {offsets = [0, 7, 0], sizes = [2, 1, 128], strides = [1, 1, 1]} : vector<2x8x128xf32> to vector<2x1x128xf32>
    %131 = vector.extract_strided_slice %0 {offsets = [7, 0, 0], sizes = [1, 16, 128], strides = [1, 1, 1]} : vector<8x16x128xf32> to vector<1x16x128xf32>
    %132 = vector.broadcast %130 : vector<2x1x128xf32> to vector<2x16x128xf32>
    %133 = vector.broadcast %131 : vector<1x16x128xf32> to vector<2x16x128xf32>
    %134 = arith.mulf %132, %133 : vector<2x16x128xf32>
    %135 = arith.addf %129, %134 : vector<2x16x128xf32>
    %136 = vector.extract_strided_slice %135 {offsets = [0, 0, 0], sizes = [2, 8, 128], strides = [1, 1, 1]} : vector<2x16x128xf32> to vector<2x8x128xf32>
    %137 = vector.extract_strided_slice %135 {offsets = [0, 8, 0], sizes = [2, 8, 128], strides = [1, 1, 1]} : vector<2x16x128xf32> to vector<2x8x128xf32>
    %c1_23 = arith.constant 1 : index
    %c0_24 = arith.constant 0 : index
    %c0_25 = arith.constant 0 : index
    %c0_26 = arith.constant 0 : index
    %138 = vector.load %arg1[%c1_23, %c0_24, %c0_25, %c0_26] : memref<8x2x8x128xf32, #tpu.memory_space<vmem>>, vector<1x2x8x128xf32>
    %139 = vector.shape_cast %138 : vector<1x2x8x128xf32> to vector<2x8x128xf32>
    %140 = arith.subf %137, %139 : vector<2x8x128xf32>
    %141 = arith.mulf %140, %140 : vector<2x8x128xf32>
    %cst_27 = arith.constant dense<0.000000e+00> : vector<2x128xf32>
    %142 = vector.multi_reduction <add>, %141, %cst_27 [1] : vector<2x8x128xf32> to vector<2x128xf32>
    %cst_28 = arith.constant -2.500000e-01 : f32
    %143 = vector.broadcast %cst_28 : f32 to vector<2x128xf32>
    %144 = arith.mulf %143, %142 : vector<2x128xf32>
    %cst_29 = arith.constant -10.1240969 : f32
    %145 = vector.broadcast %cst_29 : f32 to vector<2x128xf32>
    %146 = arith.addf %144, %145 : vector<2x128xf32>
    %147 = arith.addf %72, %146 : vector<2x128xf32>
    %cst_30 = arith.constant dense<0xFF800000> : vector<2xf32>
    %148 = vector.multi_reduction <maximumf>, %147, %cst_30 [1] : vector<2x128xf32> to vector<2xf32>
    %149 = vector.shape_cast %148 : vector<2xf32> to vector<2x1xf32>
    %150 = vector.broadcast %149 : vector<2x1xf32> to vector<2x128xf32>
    %151 = arith.subf %147, %150 : vector<2x128xf32>
    %152 = math.exp %151 : vector<2x128xf32>
    %cst_31 = arith.constant dense<0.000000e+00> : vector<2xf32>
    %153 = vector.multi_reduction <add>, %152, %cst_31 [1] : vector<2x128xf32> to vector<2xf32>
    %154 = vector.shape_cast %153 : vector<2xf32> to vector<2x1xf32>
    %155 = math.log %154 : vector<2x1xf32>
    %156 = arith.addf %149, %155 : vector<2x1xf32>
    %157 = vector.broadcast %156 : vector<2x1xf32> to vector<2x128xf32>
    %158 = arith.subf %147, %157 : vector<2x128xf32>
    %159 = math.exp %158 : vector<2x128xf32>
    %160 = vector.shape_cast %159 : vector<2x128xf32> to vector<2x1x128xf32>
    %161 = vector.broadcast %160 : vector<2x1x128xf32> to vector<2x8x128xf32>
    %162 = arith.mulf %161, %88 : vector<2x8x128xf32>
    %cst_32 = arith.constant dense<0.000000e+00> : vector<2x8xf32>
    %163 = vector.multi_reduction <add>, %162, %cst_32 [2] : vector<2x8x128xf32> to vector<2x8xf32>
    %cst_33 = arith.constant 4.85203028 : f32
    %164 = vector.broadcast %cst_33 : f32 to vector<2x1xf32>
    %165 = arith.subf %156, %164 : vector<2x1xf32>
    %166 = vector.shape_cast %165 : vector<2x1xf32> to vector<2x1xf32>
    %167 = vector.broadcast %166 : vector<2x1xf32> to vector<2x8xf32>
    %168 = tpu.concatenate %163, %167, %1 in 1 : vector<2x8xf32>, vector<2x8xf32>, vector<2x112xf32> -> vector<2x128xf32>
    %c1_34 = arith.constant 1 : index
    %c0_35 = arith.constant 0 : index
    %c0_36 = arith.constant 0 : index
    %169 = vector.load %arg4[%c1_34, %c0_35, %c0_36] : memref<8x2x128xf32, #tpu.memory_space<vmem>>, vector<1x2x128xf32>
    %170 = vector.shape_cast %169 : vector<1x2x128xf32> to vector<2x128xf32>
    %171 = vector.shape_cast %168 : vector<2x128xf32> to vector<1x2x128xf32>
    tpu.vector_store %arg4[%c1_34, %c0_35, %c0_36], %171 {strides = array<i32>} : memref<8x2x128xf32, #tpu.memory_space<vmem>>, vector<1x2x128xf32>,
    %c2 = arith.constant 2 : index
    %c0_37 = arith.constant 0 : index
    %c0_38 = arith.constant 0 : index
    %c0_39 = arith.constant 0 : index
    %172 = vector.load %arg2[%c2, %c0_37, %c0_38, %c0_39] : memref<8x2x8x128xf32, #tpu.memory_space<vmem>>, vector<1x2x8x128xf32>
    %173 = vector.shape_cast %172 : vector<1x2x8x128xf32> to vector<2x8x128xf32>
    %174 = arith.addf %136, %173 : vector<2x8x128xf32>
    %175 = vector.extract_strided_slice %174 {offsets = [0, 0, 0], sizes = [2, 1, 128], strides = [1, 1, 1]} : vector<2x8x128xf32> to vector<2x1x128xf32>
    %176 = vector.extract_strided_slice %0 {offsets = [0, 0, 0], sizes = [1, 16, 128], strides = [1, 1, 1]} : vector<8x16x128xf32> to vector<1x16x128xf32>
    %177 = vector.broadcast %175 : vector<2x1x128xf32> to vector<2x16x128xf32>
    %178 = vector.broadcast %176 : vector<1x16x128xf32> to vector<2x16x128xf32>
    %179 = arith.mulf %177, %178 : vector<2x16x128xf32>
    %180 = vector.extract_strided_slice %174 {offsets = [0, 1, 0], sizes = [2, 1, 128], strides = [1, 1, 1]} : vector<2x8x128xf32> to vector<2x1x128xf32>
    %181 = vector.extract_strided_slice %0 {offsets = [1, 0, 0], sizes = [1, 16, 128], strides = [1, 1, 1]} : vector<8x16x128xf32> to vector<1x16x128xf32>
    %182 = vector.broadcast %180 : vector<2x1x128xf32> to vector<2x16x128xf32>
    %183 = vector.broadcast %181 : vector<1x16x128xf32> to vector<2x16x128xf32>
    %184 = arith.mulf %182, %183 : vector<2x16x128xf32>
    %185 = arith.addf %179, %184 : vector<2x16x128xf32>
    %186 = vector.extract_strided_slice %174 {offsets = [0, 2, 0], sizes = [2, 1, 128], strides = [1, 1, 1]} : vector<2x8x128xf32> to vector<2x1x128xf32>
    %187 = vector.extract_strided_slice %0 {offsets = [2, 0, 0], sizes = [1, 16, 128], strides = [1, 1, 1]} : vector<8x16x128xf32> to vector<1x16x128xf32>
    %188 = vector.broadcast %186 : vector<2x1x128xf32> to vector<2x16x128xf32>
    %189 = vector.broadcast %187 : vector<1x16x128xf32> to vector<2x16x128xf32>
    %190 = arith.mulf %188, %189 : vector<2x16x128xf32>
    %191 = arith.addf %185, %190 : vector<2x16x128xf32>
    %192 = vector.extract_strided_slice %174 {offsets = [0, 3, 0], sizes = [2, 1, 128], strides = [1, 1, 1]} : vector<2x8x128xf32> to vector<2x1x128xf32>
    %193 = vector.extract_strided_slice %0 {offsets = [3, 0, 0], sizes = [1, 16, 128], strides = [1, 1, 1]} : vector<8x16x128xf32> to vector<1x16x128xf32>
    %194 = vector.broadcast %192 : vector<2x1x128xf32> to vector<2x16x128xf32>
    %195 = vector.broadcast %193 : vector<1x16x128xf32> to vector<2x16x128xf32>
    %196 = arith.mulf %194, %195 : vector<2x16x128xf32>
    %197 = arith.addf %191, %196 : vector<2x16x128xf32>
    %198 = vector.extract_strided_slice %174 {offsets = [0, 4, 0], sizes = [2, 1, 128], strides = [1, 1, 1]} : vector<2x8x128xf32> to vector<2x1x128xf32>
    %199 = vector.extract_strided_slice %0 {offsets = [4, 0, 0], sizes = [1, 16, 128], strides = [1, 1, 1]} : vector<8x16x128xf32> to vector<1x16x128xf32>
    %200 = vector.broadcast %198 : vector<2x1x128xf32> to vector<2x16x128xf32>
    %201 = vector.broadcast %199 : vector<1x16x128xf32> to vector<2x16x128xf32>
    %202 = arith.mulf %200, %201 : vector<2x16x128xf32>
    %203 = arith.addf %197, %202 : vector<2x16x128xf32>
    %204 = vector.extract_strided_slice %174 {offsets = [0, 5, 0], sizes = [2, 1, 128], strides = [1, 1, 1]} : vector<2x8x128xf32> to vector<2x1x128xf32>
    %205 = vector.extract_strided_slice %0 {offsets = [5, 0, 0], sizes = [1, 16, 128], strides = [1, 1, 1]} : vector<8x16x128xf32> to vector<1x16x128xf32>
    %206 = vector.broadcast %204 : vector<2x1x128xf32> to vector<2x16x128xf32>
    %207 = vector.broadcast %205 : vector<1x16x128xf32> to vector<2x16x128xf32>
    %208 = arith.mulf %206, %207 : vector<2x16x128xf32>
    %209 = arith.addf %203, %208 : vector<2x16x128xf32>
    %210 = vector.extract_strided_slice %174 {offsets = [0, 6, 0], sizes = [2, 1, 128], strides = [1, 1, 1]} : vector<2x8x128xf32> to vector<2x1x128xf32>
    %211 = vector.extract_strided_slice %0 {offsets = [6, 0, 0], sizes = [1, 16, 128], strides = [1, 1, 1]} : vector<8x16x128xf32> to vector<1x16x128xf32>
    %212 = vector.broadcast %210 : vector<2x1x128xf32> to vector<2x16x128xf32>
    %213 = vector.broadcast %211 : vector<1x16x128xf32> to vector<2x16x128xf32>
    %214 = arith.mulf %212, %213 : vector<2x16x128xf32>
    %215 = arith.addf %209, %214 : vector<2x16x128xf32>
    %216 = vector.extract_strided_slice %174 {offsets = [0, 7, 0], sizes = [2, 1, 128], strides = [1, 1, 1]} : vector<2x8x128xf32> to vector<2x1x128xf32>
    %217 = vector.extract_strided_slice %0 {offsets = [7, 0, 0], sizes = [1, 16, 128], strides = [1, 1, 1]} : vector<8x16x128xf32> to vector<1x16x128xf32>
    %218 = vector.broadcast %216 : vector<2x1x128xf32> to vector<2x16x128xf32>
    %219 = vector.broadcast %217 : vector<1x16x128xf32> to vector<2x16x128xf32>
    %220 = arith.mulf %218, %219 : vector<2x16x128xf32>
    %221 = arith.addf %215, %220 : vector<2x16x128xf32>
    %222 = vector.extract_strided_slice %221 {offsets = [0, 0, 0], sizes = [2, 8, 128], strides = [1, 1, 1]} : vector<2x16x128xf32> to vector<2x8x128xf32>
    %223 = vector.extract_strided_slice %221 {offsets = [0, 8, 0], sizes = [2, 8, 128], strides = [1, 1, 1]} : vector<2x16x128xf32> to vector<2x8x128xf32>
    %c2_40 = arith.constant 2 : index
    %c0_41 = arith.constant 0 : index
    %c0_42 = arith.constant 0 : index
    %c0_43 = arith.constant 0 : index
    %224 = vector.load %arg1[%c2_40, %c0_41, %c0_42, %c0_43] : memref<8x2x8x128xf32, #tpu.memory_space<vmem>>, vector<1x2x8x128xf32>
    %225 = vector.shape_cast %224 : vector<1x2x8x128xf32> to vector<2x8x128xf32>
    %226 = arith.subf %223, %225 : vector<2x8x128xf32>
    %227 = arith.mulf %226, %226 : vector<2x8x128xf32>
    %cst_44 = arith.constant dense<0.000000e+00> : vector<2x128xf32>
    %228 = vector.multi_reduction <add>, %227, %cst_44 [1] : vector<2x8x128xf32> to vector<2x128xf32>
    %cst_45 = arith.constant -2.500000e-01 : f32
    %229 = vector.broadcast %cst_45 : f32 to vector<2x128xf32>
    %230 = arith.mulf %229, %228 : vector<2x128xf32>
    %cst_46 = arith.constant -10.1240969 : f32
    %231 = vector.broadcast %cst_46 : f32 to vector<2x128xf32>
    %232 = arith.addf %230, %231 : vector<2x128xf32>
    %233 = arith.addf %158, %232 : vector<2x128xf32>
    %cst_47 = arith.constant dense<0xFF800000> : vector<2xf32>
    %234 = vector.multi_reduction <maximumf>, %233, %cst_47 [1] : vector<2x128xf32> to vector<2xf32>
    %235 = vector.shape_cast %234 : vector<2xf32> to vector<2x1xf32>
    %236 = vector.broadcast %235 : vector<2x1xf32> to vector<2x128xf32>
    %237 = arith.subf %233, %236 : vector<2x128xf32>
    %238 = math.exp %237 : vector<2x128xf32>
    %cst_48 = arith.constant dense<0.000000e+00> : vector<2xf32>
    %239 = vector.multi_reduction <add>, %238, %cst_48 [1] : vector<2x128xf32> to vector<2xf32>
    %240 = vector.shape_cast %239 : vector<2xf32> to vector<2x1xf32>
    %241 = math.log %240 : vector<2x1xf32>
    %242 = arith.addf %235, %241 : vector<2x1xf32>
    %243 = vector.broadcast %242 : vector<2x1xf32> to vector<2x128xf32>
    %244 = arith.subf %233, %243 : vector<2x128xf32>
    %245 = math.exp %244 : vector<2x128xf32>
    %246 = vector.shape_cast %245 : vector<2x128xf32> to vector<2x1x128xf32>
    %247 = vector.broadcast %246 : vector<2x1x128xf32> to vector<2x8x128xf32>
    %248 = arith.mulf %247, %174 : vector<2x8x128xf32>
    %cst_49 = arith.constant dense<0.000000e+00> : vector<2x8xf32>
    %249 = vector.multi_reduction <add>, %248, %cst_49 [2] : vector<2x8x128xf32> to vector<2x8xf32>
    %cst_50 = arith.constant 4.85203028 : f32
    %250 = vector.broadcast %cst_50 : f32 to vector<2x1xf32>
    %251 = arith.subf %242, %250 : vector<2x1xf32>
    %252 = vector.shape_cast %251 : vector<2x1xf32> to vector<2x1xf32>
    %253 = vector.broadcast %252 : vector<2x1xf32> to vector<2x8xf32>
    %254 = tpu.concatenate %249, %253, %1 in 1 : vector<2x8xf32>, vector<2x8xf32>, vector<2x112xf32> -> vector<2x128xf32>
    %c2_51 = arith.constant 2 : index
    %c0_52 = arith.constant 0 : index
    %c0_53 = arith.constant 0 : index
    %255 = vector.load %arg4[%c2_51, %c0_52, %c0_53] : memref<8x2x128xf32, #tpu.memory_space<vmem>>, vector<1x2x128xf32>
    %256 = vector.shape_cast %255 : vector<1x2x128xf32> to vector<2x128xf32>
    %257 = vector.shape_cast %254 : vector<2x128xf32> to vector<1x2x128xf32>
    tpu.vector_store %arg4[%c2_51, %c0_52, %c0_53], %257 {strides = array<i32>} : memref<8x2x128xf32, #tpu.memory_space<vmem>>, vector<1x2x128xf32>,
    %c3 = arith.constant 3 : index
    %c0_54 = arith.constant 0 : index
    %c0_55 = arith.constant 0 : index
    %c0_56 = arith.constant 0 : index
    %258 = vector.load %arg2[%c3, %c0_54, %c0_55, %c0_56] : memref<8x2x8x128xf32, #tpu.memory_space<vmem>>, vector<1x2x8x128xf32>
    %259 = vector.shape_cast %258 : vector<1x2x8x128xf32> to vector<2x8x128xf32>
    %260 = arith.addf %222, %259 : vector<2x8x128xf32>
    %261 = vector.extract_strided_slice %260 {offsets = [0, 0, 0], sizes = [2, 1, 128], strides = [1, 1, 1]} : vector<2x8x128xf32> to vector<2x1x128xf32>
    %262 = vector.extract_strided_slice %0 {offsets = [0, 0, 0], sizes = [1, 16, 128], strides = [1, 1, 1]} : vector<8x16x128xf32> to vector<1x16x128xf32>
    %263 = vector.broadcast %261 : vector<2x1x128xf32> to vector<2x16x128xf32>
    %264 = vector.broadcast %262 : vector<1x16x128xf32> to vector<2x16x128xf32>
    %265 = arith.mulf %263, %264 : vector<2x16x128xf32>
    %266 = vector.extract_strided_slice %260 {offsets = [0, 1, 0], sizes = [2, 1, 128], strides = [1, 1, 1]} : vector<2x8x128xf32> to vector<2x1x128xf32>
    %267 = vector.extract_strided_slice %0 {offsets = [1, 0, 0], sizes = [1, 16, 128], strides = [1, 1, 1]} : vector<8x16x128xf32> to vector<1x16x128xf32>
    %268 = vector.broadcast %266 : vector<2x1x128xf32> to vector<2x16x128xf32>
    %269 = vector.broadcast %267 : vector<1x16x128xf32> to vector<2x16x128xf32>
    %270 = arith.mulf %268, %269 : vector<2x16x128xf32>
    %271 = arith.addf %265, %270 : vector<2x16x128xf32>
    %272 = vector.extract_strided_slice %260 {offsets = [0, 2, 0], sizes = [2, 1, 128], strides = [1, 1, 1]} : vector<2x8x128xf32> to vector<2x1x128xf32>
    %273 = vector.extract_strided_slice %0 {offsets = [2, 0, 0], sizes = [1, 16, 128], strides = [1, 1, 1]} : vector<8x16x128xf32> to vector<1x16x128xf32>
    %274 = vector.broadcast %272 : vector<2x1x128xf32> to vector<2x16x128xf32>
    %275 = vector.broadcast %273 : vector<1x16x128xf32> to vector<2x16x128xf32>
    %276 = arith.mulf %274, %275 : vector<2x16x128xf32>
    %277 = arith.addf %271, %276 : vector<2x16x128xf32>
    %278 = vector.extract_strided_slice %260 {offsets = [0, 3, 0], sizes = [2, 1, 128], strides = [1, 1, 1]} : vector<2x8x128xf32> to vector<2x1x128xf32>
    %279 = vector.extract_strided_slice %0 {offsets = [3, 0, 0], sizes = [1, 16, 128], strides = [1, 1, 1]} : vector<8x16x128xf32> to vector<1x16x128xf32>
    %280 = vector.broadcast %278 : vector<2x1x128xf32> to vector<2x16x128xf32>
    %281 = vector.broadcast %279 : vector<1x16x128xf32> to vector<2x16x128xf32>
    %282 = arith.mulf %280, %281 : vector<2x16x128xf32>
    %283 = arith.addf %277, %282 : vector<2x16x128xf32>
    %284 = vector.extract_strided_slice %260 {offsets = [0, 4, 0], sizes = [2, 1, 128], strides = [1, 1, 1]} : vector<2x8x128xf32> to vector<2x1x128xf32>
    %285 = vector.extract_strided_slice %0 {offsets = [4, 0, 0], sizes = [1, 16, 128], strides = [1, 1, 1]} : vector<8x16x128xf32> to vector<1x16x128xf32>
    %286 = vector.broadcast %284 : vector<2x1x128xf32> to vector<2x16x128xf32>
    %287 = vector.broadcast %285 : vector<1x16x128xf32> to vector<2x16x128xf32>
    %288 = arith.mulf %286, %287 : vector<2x16x128xf32>
    %289 = arith.addf %283, %288 : vector<2x16x128xf32>
    %290 = vector.extract_strided_slice %260 {offsets = [0, 5, 0], sizes = [2, 1, 128], strides = [1, 1, 1]} : vector<2x8x128xf32> to vector<2x1x128xf32>
    %291 = vector.extract_strided_slice %0 {offsets = [5, 0, 0], sizes = [1, 16, 128], strides = [1, 1, 1]} : vector<8x16x128xf32> to vector<1x16x128xf32>
    %292 = vector.broadcast %290 : vector<2x1x128xf32> to vector<2x16x128xf32>
    %293 = vector.broadcast %291 : vector<1x16x128xf32> to vector<2x16x128xf32>
    %294 = arith.mulf %292, %293 : vector<2x16x128xf32>
    %295 = arith.addf %289, %294 : vector<2x16x128xf32>
    %296 = vector.extract_strided_slice %260 {offsets = [0, 6, 0], sizes = [2, 1, 128], strides = [1, 1, 1]} : vector<2x8x128xf32> to vector<2x1x128xf32>
    %297 = vector.extract_strided_slice %0 {offsets = [6, 0, 0], sizes = [1, 16, 128], strides = [1, 1, 1]} : vector<8x16x128xf32> to vector<1x16x128xf32>
    %298 = vector.broadcast %296 : vector<2x1x128xf32> to vector<2x16x128xf32>
    %299 = vector.broadcast %297 : vector<1x16x128xf32> to vector<2x16x128xf32>
    %300 = arith.mulf %298, %299 : vector<2x16x128xf32>
    %301 = arith.addf %295, %300 : vector<2x16x128xf32>
    %302 = vector.extract_strided_slice %260 {offsets = [0, 7, 0], sizes = [2, 1, 128], strides = [1, 1, 1]} : vector<2x8x128xf32> to vector<2x1x128xf32>
    %303 = vector.extract_strided_slice %0 {offsets = [7, 0, 0], sizes = [1, 16, 128], strides = [1, 1, 1]} : vector<8x16x128xf32> to vector<1x16x128xf32>
    %304 = vector.broadcast %302 : vector<2x1x128xf32> to vector<2x16x128xf32>
    %305 = vector.broadcast %303 : vector<1x16x128xf32> to vector<2x16x128xf32>
    %306 = arith.mulf %304, %305 : vector<2x16x128xf32>
    %307 = arith.addf %301, %306 : vector<2x16x128xf32>
    %308 = vector.extract_strided_slice %307 {offsets = [0, 0, 0], sizes = [2, 8, 128], strides = [1, 1, 1]} : vector<2x16x128xf32> to vector<2x8x128xf32>
    %309 = vector.extract_strided_slice %307 {offsets = [0, 8, 0], sizes = [2, 8, 128], strides = [1, 1, 1]} : vector<2x16x128xf32> to vector<2x8x128xf32>
    %c3_57 = arith.constant 3 : index
    %c0_58 = arith.constant 0 : index
    %c0_59 = arith.constant 0 : index
    %c0_60 = arith.constant 0 : index
    %310 = vector.load %arg1[%c3_57, %c0_58, %c0_59, %c0_60] : memref<8x2x8x128xf32, #tpu.memory_space<vmem>>, vector<1x2x8x128xf32>
    %311 = vector.shape_cast %310 : vector<1x2x8x128xf32> to vector<2x8x128xf32>
    %312 = arith.subf %309, %311 : vector<2x8x128xf32>
    %313 = arith.mulf %312, %312 : vector<2x8x128xf32>
    %cst_61 = arith.constant dense<0.000000e+00> : vector<2x128xf32>
    %314 = vector.multi_reduction <add>, %313, %cst_61 [1] : vector<2x8x128xf32> to vector<2x128xf32>
    %cst_62 = arith.constant -2.500000e-01 : f32
    %315 = vector.broadcast %cst_62 : f32 to vector<2x128xf32>
    %316 = arith.mulf %315, %314 : vector<2x128xf32>
    %cst_63 = arith.constant -10.1240969 : f32
    %317 = vector.broadcast %cst_63 : f32 to vector<2x128xf32>
    %318 = arith.addf %316, %317 : vector<2x128xf32>
    %319 = arith.addf %244, %318 : vector<2x128xf32>
    %cst_64 = arith.constant dense<0xFF800000> : vector<2xf32>
    %320 = vector.multi_reduction <maximumf>, %319, %cst_64 [1] : vector<2x128xf32> to vector<2xf32>
    %321 = vector.shape_cast %320 : vector<2xf32> to vector<2x1xf32>
    %322 = vector.broadcast %321 : vector<2x1xf32> to vector<2x128xf32>
    %323 = arith.subf %319, %322 : vector<2x128xf32>
    %324 = math.exp %323 : vector<2x128xf32>
    %cst_65 = arith.constant dense<0.000000e+00> : vector<2xf32>
    %325 = vector.multi_reduction <add>, %324, %cst_65 [1] : vector<2x128xf32> to vector<2xf32>
    %326 = vector.shape_cast %325 : vector<2xf32> to vector<2x1xf32>
    %327 = math.log %326 : vector<2x1xf32>
    %328 = arith.addf %321, %327 : vector<2x1xf32>
    %329 = vector.broadcast %328 : vector<2x1xf32> to vector<2x128xf32>
    %330 = arith.subf %319, %329 : vector<2x128xf32>
    %331 = math.exp %330 : vector<2x128xf32>
    %332 = vector.shape_cast %331 : vector<2x128xf32> to vector<2x1x128xf32>
    %333 = vector.broadcast %332 : vector<2x1x128xf32> to vector<2x8x128xf32>
    %334 = arith.mulf %333, %260 : vector<2x8x128xf32>
    %cst_66 = arith.constant dense<0.000000e+00> : vector<2x8xf32>
    %335 = vector.multi_reduction <add>, %334, %cst_66 [2] : vector<2x8x128xf32> to vector<2x8xf32>
    %cst_67 = arith.constant 4.85203028 : f32
    %336 = vector.broadcast %cst_67 : f32 to vector<2x1xf32>
    %337 = arith.subf %328, %336 : vector<2x1xf32>
    %338 = vector.shape_cast %337 : vector<2x1xf32> to vector<2x1xf32>
    %339 = vector.broadcast %338 : vector<2x1xf32> to vector<2x8xf32>
    %340 = tpu.concatenate %335, %339, %1 in 1 : vector<2x8xf32>, vector<2x8xf32>, vector<2x112xf32> -> vector<2x128xf32>
    %c3_68 = arith.constant 3 : index
    %c0_69 = arith.constant 0 : index
    %c0_70 = arith.constant 0 : index
    %341 = vector.load %arg4[%c3_68, %c0_69, %c0_70] : memref<8x2x128xf32, #tpu.memory_space<vmem>>, vector<1x2x128xf32>
    %342 = vector.shape_cast %341 : vector<1x2x128xf32> to vector<2x128xf32>
    %343 = vector.shape_cast %340 : vector<2x128xf32> to vector<1x2x128xf32>
    tpu.vector_store %arg4[%c3_68, %c0_69, %c0_70], %343 {strides = array<i32>} : memref<8x2x128xf32, #tpu.memory_space<vmem>>, vector<1x2x128xf32>,
    %c4 = arith.constant 4 : index
    %c0_71 = arith.constant 0 : index
    %c0_72 = arith.constant 0 : index
    %c0_73 = arith.constant 0 : index
    %344 = vector.load %arg2[%c4, %c0_71, %c0_72, %c0_73] : memref<8x2x8x128xf32, #tpu.memory_space<vmem>>, vector<1x2x8x128xf32>
    %345 = vector.shape_cast %344 : vector<1x2x8x128xf32> to vector<2x8x128xf32>
    %346 = arith.addf %308, %345 : vector<2x8x128xf32>
    %347 = vector.extract_strided_slice %346 {offsets = [0, 0, 0], sizes = [2, 1, 128], strides = [1, 1, 1]} : vector<2x8x128xf32> to vector<2x1x128xf32>
    %348 = vector.extract_strided_slice %0 {offsets = [0, 0, 0], sizes = [1, 16, 128], strides = [1, 1, 1]} : vector<8x16x128xf32> to vector<1x16x128xf32>
    %349 = vector.broadcast %347 : vector<2x1x128xf32> to vector<2x16x128xf32>
    %350 = vector.broadcast %348 : vector<1x16x128xf32> to vector<2x16x128xf32>
    %351 = arith.mulf %349, %350 : vector<2x16x128xf32>
    %352 = vector.extract_strided_slice %346 {offsets = [0, 1, 0], sizes = [2, 1, 128], strides = [1, 1, 1]} : vector<2x8x128xf32> to vector<2x1x128xf32>
    %353 = vector.extract_strided_slice %0 {offsets = [1, 0, 0], sizes = [1, 16, 128], strides = [1, 1, 1]} : vector<8x16x128xf32> to vector<1x16x128xf32>
    %354 = vector.broadcast %352 : vector<2x1x128xf32> to vector<2x16x128xf32>
    %355 = vector.broadcast %353 : vector<1x16x128xf32> to vector<2x16x128xf32>
    %356 = arith.mulf %354, %355 : vector<2x16x128xf32>
    %357 = arith.addf %351, %356 : vector<2x16x128xf32>
    %358 = vector.extract_strided_slice %346 {offsets = [0, 2, 0], sizes = [2, 1, 128], strides = [1, 1, 1]} : vector<2x8x128xf32> to vector<2x1x128xf32>
    %359 = vector.extract_strided_slice %0 {offsets = [2, 0, 0], sizes = [1, 16, 128], strides = [1, 1, 1]} : vector<8x16x128xf32> to vector<1x16x128xf32>
    %360 = vector.broadcast %358 : vector<2x1x128xf32> to vector<2x16x128xf32>
    %361 = vector.broadcast %359 : vector<1x16x128xf32> to vector<2x16x128xf32>
    %362 = arith.mulf %360, %361 : vector<2x16x128xf32>
    %363 = arith.addf %357, %362 : vector<2x16x128xf32>
    %364 = vector.extract_strided_slice %346 {offsets = [0, 3, 0], sizes = [2, 1, 128], strides = [1, 1, 1]} : vector<2x8x128xf32> to vector<2x1x128xf32>
    %365 = vector.extract_strided_slice %0 {offsets = [3, 0, 0], sizes = [1, 16, 128], strides = [1, 1, 1]} : vector<8x16x128xf32> to vector<1x16x128xf32>
    %366 = vector.broadcast %364 : vector<2x1x128xf32> to vector<2x16x128xf32>
    %367 = vector.broadcast %365 : vector<1x16x128xf32> to vector<2x16x128xf32>
    %368 = arith.mulf %366, %367 : vector<2x16x128xf32>
    %369 = arith.addf %363, %368 : vector<2x16x128xf32>
    %370 = vector.extract_strided_slice %346 {offsets = [0, 4, 0], sizes = [2, 1, 128], strides = [1, 1, 1]} : vector<2x8x128xf32> to vector<2x1x128xf32>
    %371 = vector.extract_strided_slice %0 {offsets = [4, 0, 0], sizes = [1, 16, 128], strides = [1, 1, 1]} : vector<8x16x128xf32> to vector<1x16x128xf32>
    %372 = vector.broadcast %370 : vector<2x1x128xf32> to vector<2x16x128xf32>
    %373 = vector.broadcast %371 : vector<1x16x128xf32> to vector<2x16x128xf32>
    %374 = arith.mulf %372, %373 : vector<2x16x128xf32>
    %375 = arith.addf %369, %374 : vector<2x16x128xf32>
    %376 = vector.extract_strided_slice %346 {offsets = [0, 5, 0], sizes = [2, 1, 128], strides = [1, 1, 1]} : vector<2x8x128xf32> to vector<2x1x128xf32>
    %377 = vector.extract_strided_slice %0 {offsets = [5, 0, 0], sizes = [1, 16, 128], strides = [1, 1, 1]} : vector<8x16x128xf32> to vector<1x16x128xf32>
    %378 = vector.broadcast %376 : vector<2x1x128xf32> to vector<2x16x128xf32>
    %379 = vector.broadcast %377 : vector<1x16x128xf32> to vector<2x16x128xf32>
    %380 = arith.mulf %378, %379 : vector<2x16x128xf32>
    %381 = arith.addf %375, %380 : vector<2x16x128xf32>
    %382 = vector.extract_strided_slice %346 {offsets = [0, 6, 0], sizes = [2, 1, 128], strides = [1, 1, 1]} : vector<2x8x128xf32> to vector<2x1x128xf32>
    %383 = vector.extract_strided_slice %0 {offsets = [6, 0, 0], sizes = [1, 16, 128], strides = [1, 1, 1]} : vector<8x16x128xf32> to vector<1x16x128xf32>
    %384 = vector.broadcast %382 : vector<2x1x128xf32> to vector<2x16x128xf32>
    %385 = vector.broadcast %383 : vector<1x16x128xf32> to vector<2x16x128xf32>
    %386 = arith.mulf %384, %385 : vector<2x16x128xf32>
    %387 = arith.addf %381, %386 : vector<2x16x128xf32>
    %388 = vector.extract_strided_slice %346 {offsets = [0, 7, 0], sizes = [2, 1, 128], strides = [1, 1, 1]} : vector<2x8x128xf32> to vector<2x1x128xf32>
    %389 = vector.extract_strided_slice %0 {offsets = [7, 0, 0], sizes = [1, 16, 128], strides = [1, 1, 1]} : vector<8x16x128xf32> to vector<1x16x128xf32>
    %390 = vector.broadcast %388 : vector<2x1x128xf32> to vector<2x16x128xf32>
    %391 = vector.broadcast %389 : vector<1x16x128xf32> to vector<2x16x128xf32>
    %392 = arith.mulf %390, %391 : vector<2x16x128xf32>
    %393 = arith.addf %387, %392 : vector<2x16x128xf32>
    %394 = vector.extract_strided_slice %393 {offsets = [0, 0, 0], sizes = [2, 8, 128], strides = [1, 1, 1]} : vector<2x16x128xf32> to vector<2x8x128xf32>
    %395 = vector.extract_strided_slice %393 {offsets = [0, 8, 0], sizes = [2, 8, 128], strides = [1, 1, 1]} : vector<2x16x128xf32> to vector<2x8x128xf32>
    %c4_74 = arith.constant 4 : index
    %c0_75 = arith.constant 0 : index
    %c0_76 = arith.constant 0 : index
    %c0_77 = arith.constant 0 : index
    %396 = vector.load %arg1[%c4_74, %c0_75, %c0_76, %c0_77] : memref<8x2x8x128xf32, #tpu.memory_space<vmem>>, vector<1x2x8x128xf32>
    %397 = vector.shape_cast %396 : vector<1x2x8x128xf32> to vector<2x8x128xf32>
    %398 = arith.subf %395, %397 : vector<2x8x128xf32>
    %399 = arith.mulf %398, %398 : vector<2x8x128xf32>
    %cst_78 = arith.constant dense<0.000000e+00> : vector<2x128xf32>
    %400 = vector.multi_reduction <add>, %399, %cst_78 [1] : vector<2x8x128xf32> to vector<2x128xf32>
    %cst_79 = arith.constant -2.500000e-01 : f32
    %401 = vector.broadcast %cst_79 : f32 to vector<2x128xf32>
    %402 = arith.mulf %401, %400 : vector<2x128xf32>
    %cst_80 = arith.constant -10.1240969 : f32
    %403 = vector.broadcast %cst_80 : f32 to vector<2x128xf32>
    %404 = arith.addf %402, %403 : vector<2x128xf32>
    %405 = arith.addf %330, %404 : vector<2x128xf32>
    %cst_81 = arith.constant dense<0xFF800000> : vector<2xf32>
    %406 = vector.multi_reduction <maximumf>, %405, %cst_81 [1] : vector<2x128xf32> to vector<2xf32>
    %407 = vector.shape_cast %406 : vector<2xf32> to vector<2x1xf32>
    %408 = vector.broadcast %407 : vector<2x1xf32> to vector<2x128xf32>
    %409 = arith.subf %405, %408 : vector<2x128xf32>
    %410 = math.exp %409 : vector<2x128xf32>
    %cst_82 = arith.constant dense<0.000000e+00> : vector<2xf32>
    %411 = vector.multi_reduction <add>, %410, %cst_82 [1] : vector<2x128xf32> to vector<2xf32>
    %412 = vector.shape_cast %411 : vector<2xf32> to vector<2x1xf32>
    %413 = math.log %412 : vector<2x1xf32>
    %414 = arith.addf %407, %413 : vector<2x1xf32>
    %415 = vector.broadcast %414 : vector<2x1xf32> to vector<2x128xf32>
    %416 = arith.subf %405, %415 : vector<2x128xf32>
    %417 = math.exp %416 : vector<2x128xf32>
    %418 = vector.shape_cast %417 : vector<2x128xf32> to vector<2x1x128xf32>
    %419 = vector.broadcast %418 : vector<2x1x128xf32> to vector<2x8x128xf32>
    %420 = arith.mulf %419, %346 : vector<2x8x128xf32>
    %cst_83 = arith.constant dense<0.000000e+00> : vector<2x8xf32>
    %421 = vector.multi_reduction <add>, %420, %cst_83 [2] : vector<2x8x128xf32> to vector<2x8xf32>
    %cst_84 = arith.constant 4.85203028 : f32
    %422 = vector.broadcast %cst_84 : f32 to vector<2x1xf32>
    %423 = arith.subf %414, %422 : vector<2x1xf32>
    %424 = vector.shape_cast %423 : vector<2x1xf32> to vector<2x1xf32>
    %425 = vector.broadcast %424 : vector<2x1xf32> to vector<2x8xf32>
    %426 = tpu.concatenate %421, %425, %1 in 1 : vector<2x8xf32>, vector<2x8xf32>, vector<2x112xf32> -> vector<2x128xf32>
    %c4_85 = arith.constant 4 : index
    %c0_86 = arith.constant 0 : index
    %c0_87 = arith.constant 0 : index
    %427 = vector.load %arg4[%c4_85, %c0_86, %c0_87] : memref<8x2x128xf32, #tpu.memory_space<vmem>>, vector<1x2x128xf32>
    %428 = vector.shape_cast %427 : vector<1x2x128xf32> to vector<2x128xf32>
    %429 = vector.shape_cast %426 : vector<2x128xf32> to vector<1x2x128xf32>
    tpu.vector_store %arg4[%c4_85, %c0_86, %c0_87], %429 {strides = array<i32>} : memref<8x2x128xf32, #tpu.memory_space<vmem>>, vector<1x2x128xf32>,
    %c5 = arith.constant 5 : index
    %c0_88 = arith.constant 0 : index
    %c0_89 = arith.constant 0 : index
    %c0_90 = arith.constant 0 : index
    %430 = vector.load %arg2[%c5, %c0_88, %c0_89, %c0_90] : memref<8x2x8x128xf32, #tpu.memory_space<vmem>>, vector<1x2x8x128xf32>
    %431 = vector.shape_cast %430 : vector<1x2x8x128xf32> to vector<2x8x128xf32>
    %432 = arith.addf %394, %431 : vector<2x8x128xf32>
    %433 = vector.extract_strided_slice %432 {offsets = [0, 0, 0], sizes = [2, 1, 128], strides = [1, 1, 1]} : vector<2x8x128xf32> to vector<2x1x128xf32>
    %434 = vector.extract_strided_slice %0 {offsets = [0, 0, 0], sizes = [1, 16, 128], strides = [1, 1, 1]} : vector<8x16x128xf32> to vector<1x16x128xf32>
    %435 = vector.broadcast %433 : vector<2x1x128xf32> to vector<2x16x128xf32>
    %436 = vector.broadcast %434 : vector<1x16x128xf32> to vector<2x16x128xf32>
    %437 = arith.mulf %435, %436 : vector<2x16x128xf32>
    %438 = vector.extract_strided_slice %432 {offsets = [0, 1, 0], sizes = [2, 1, 128], strides = [1, 1, 1]} : vector<2x8x128xf32> to vector<2x1x128xf32>
    %439 = vector.extract_strided_slice %0 {offsets = [1, 0, 0], sizes = [1, 16, 128], strides = [1, 1, 1]} : vector<8x16x128xf32> to vector<1x16x128xf32>
    %440 = vector.broadcast %438 : vector<2x1x128xf32> to vector<2x16x128xf32>
    %441 = vector.broadcast %439 : vector<1x16x128xf32> to vector<2x16x128xf32>
    %442 = arith.mulf %440, %441 : vector<2x16x128xf32>
    %443 = arith.addf %437, %442 : vector<2x16x128xf32>
    %444 = vector.extract_strided_slice %432 {offsets = [0, 2, 0], sizes = [2, 1, 128], strides = [1, 1, 1]} : vector<2x8x128xf32> to vector<2x1x128xf32>
    %445 = vector.extract_strided_slice %0 {offsets = [2, 0, 0], sizes = [1, 16, 128], strides = [1, 1, 1]} : vector<8x16x128xf32> to vector<1x16x128xf32>
    %446 = vector.broadcast %444 : vector<2x1x128xf32> to vector<2x16x128xf32>
    %447 = vector.broadcast %445 : vector<1x16x128xf32> to vector<2x16x128xf32>
    %448 = arith.mulf %446, %447 : vector<2x16x128xf32>
    %449 = arith.addf %443, %448 : vector<2x16x128xf32>
    %450 = vector.extract_strided_slice %432 {offsets = [0, 3, 0], sizes = [2, 1, 128], strides = [1, 1, 1]} : vector<2x8x128xf32> to vector<2x1x128xf32>
    %451 = vector.extract_strided_slice %0 {offsets = [3, 0, 0], sizes = [1, 16, 128], strides = [1, 1, 1]} : vector<8x16x128xf32> to vector<1x16x128xf32>
    %452 = vector.broadcast %450 : vector<2x1x128xf32> to vector<2x16x128xf32>
    %453 = vector.broadcast %451 : vector<1x16x128xf32> to vector<2x16x128xf32>
    %454 = arith.mulf %452, %453 : vector<2x16x128xf32>
    %455 = arith.addf %449, %454 : vector<2x16x128xf32>
    %456 = vector.extract_strided_slice %432 {offsets = [0, 4, 0], sizes = [2, 1, 128], strides = [1, 1, 1]} : vector<2x8x128xf32> to vector<2x1x128xf32>
    %457 = vector.extract_strided_slice %0 {offsets = [4, 0, 0], sizes = [1, 16, 128], strides = [1, 1, 1]} : vector<8x16x128xf32> to vector<1x16x128xf32>
    %458 = vector.broadcast %456 : vector<2x1x128xf32> to vector<2x16x128xf32>
    %459 = vector.broadcast %457 : vector<1x16x128xf32> to vector<2x16x128xf32>
    %460 = arith.mulf %458, %459 : vector<2x16x128xf32>
    %461 = arith.addf %455, %460 : vector<2x16x128xf32>
    %462 = vector.extract_strided_slice %432 {offsets = [0, 5, 0], sizes = [2, 1, 128], strides = [1, 1, 1]} : vector<2x8x128xf32> to vector<2x1x128xf32>
    %463 = vector.extract_strided_slice %0 {offsets = [5, 0, 0], sizes = [1, 16, 128], strides = [1, 1, 1]} : vector<8x16x128xf32> to vector<1x16x128xf32>
    %464 = vector.broadcast %462 : vector<2x1x128xf32> to vector<2x16x128xf32>
    %465 = vector.broadcast %463 : vector<1x16x128xf32> to vector<2x16x128xf32>
    %466 = arith.mulf %464, %465 : vector<2x16x128xf32>
    %467 = arith.addf %461, %466 : vector<2x16x128xf32>
    %468 = vector.extract_strided_slice %432 {offsets = [0, 6, 0], sizes = [2, 1, 128], strides = [1, 1, 1]} : vector<2x8x128xf32> to vector<2x1x128xf32>
    %469 = vector.extract_strided_slice %0 {offsets = [6, 0, 0], sizes = [1, 16, 128], strides = [1, 1, 1]} : vector<8x16x128xf32> to vector<1x16x128xf32>
    %470 = vector.broadcast %468 : vector<2x1x128xf32> to vector<2x16x128xf32>
    %471 = vector.broadcast %469 : vector<1x16x128xf32> to vector<2x16x128xf32>
    %472 = arith.mulf %470, %471 : vector<2x16x128xf32>
    %473 = arith.addf %467, %472 : vector<2x16x128xf32>
    %474 = vector.extract_strided_slice %432 {offsets = [0, 7, 0], sizes = [2, 1, 128], strides = [1, 1, 1]} : vector<2x8x128xf32> to vector<2x1x128xf32>
    %475 = vector.extract_strided_slice %0 {offsets = [7, 0, 0], sizes = [1, 16, 128], strides = [1, 1, 1]} : vector<8x16x128xf32> to vector<1x16x128xf32>
    %476 = vector.broadcast %474 : vector<2x1x128xf32> to vector<2x16x128xf32>
    %477 = vector.broadcast %475 : vector<1x16x128xf32> to vector<2x16x128xf32>
    %478 = arith.mulf %476, %477 : vector<2x16x128xf32>
    %479 = arith.addf %473, %478 : vector<2x16x128xf32>
    %480 = vector.extract_strided_slice %479 {offsets = [0, 0, 0], sizes = [2, 8, 128], strides = [1, 1, 1]} : vector<2x16x128xf32> to vector<2x8x128xf32>
    %481 = vector.extract_strided_slice %479 {offsets = [0, 8, 0], sizes = [2, 8, 128], strides = [1, 1, 1]} : vector<2x16x128xf32> to vector<2x8x128xf32>
    %c5_91 = arith.constant 5 : index
    %c0_92 = arith.constant 0 : index
    %c0_93 = arith.constant 0 : index
    %c0_94 = arith.constant 0 : index
    %482 = vector.load %arg1[%c5_91, %c0_92, %c0_93, %c0_94] : memref<8x2x8x128xf32, #tpu.memory_space<vmem>>, vector<1x2x8x128xf32>
    %483 = vector.shape_cast %482 : vector<1x2x8x128xf32> to vector<2x8x128xf32>
    %484 = arith.subf %481, %483 : vector<2x8x128xf32>
    %485 = arith.mulf %484, %484 : vector<2x8x128xf32>
    %cst_95 = arith.constant dense<0.000000e+00> : vector<2x128xf32>
    %486 = vector.multi_reduction <add>, %485, %cst_95 [1] : vector<2x8x128xf32> to vector<2x128xf32>
    %cst_96 = arith.constant -2.500000e-01 : f32
    %487 = vector.broadcast %cst_96 : f32 to vector<2x128xf32>
    %488 = arith.mulf %487, %486 : vector<2x128xf32>
    %cst_97 = arith.constant -10.1240969 : f32
    %489 = vector.broadcast %cst_97 : f32 to vector<2x128xf32>
    %490 = arith.addf %488, %489 : vector<2x128xf32>
    %491 = arith.addf %416, %490 : vector<2x128xf32>
    %cst_98 = arith.constant dense<0xFF800000> : vector<2xf32>
    %492 = vector.multi_reduction <maximumf>, %491, %cst_98 [1] : vector<2x128xf32> to vector<2xf32>
    %493 = vector.shape_cast %492 : vector<2xf32> to vector<2x1xf32>
    %494 = vector.broadcast %493 : vector<2x1xf32> to vector<2x128xf32>
    %495 = arith.subf %491, %494 : vector<2x128xf32>
    %496 = math.exp %495 : vector<2x128xf32>
    %cst_99 = arith.constant dense<0.000000e+00> : vector<2xf32>
    %497 = vector.multi_reduction <add>, %496, %cst_99 [1] : vector<2x128xf32> to vector<2xf32>
    %498 = vector.shape_cast %497 : vector<2xf32> to vector<2x1xf32>
    %499 = math.log %498 : vector<2x1xf32>
    %500 = arith.addf %493, %499 : vector<2x1xf32>
    %501 = vector.broadcast %500 : vector<2x1xf32> to vector<2x128xf32>
    %502 = arith.subf %491, %501 : vector<2x128xf32>
    %503 = math.exp %502 : vector<2x128xf32>
    %504 = vector.shape_cast %503 : vector<2x128xf32> to vector<2x1x128xf32>
    %505 = vector.broadcast %504 : vector<2x1x128xf32> to vector<2x8x128xf32>
    %506 = arith.mulf %505, %432 : vector<2x8x128xf32>
    %cst_100 = arith.constant dense<0.000000e+00> : vector<2x8xf32>
    %507 = vector.multi_reduction <add>, %506, %cst_100 [2] : vector<2x8x128xf32> to vector<2x8xf32>
    %cst_101 = arith.constant 4.85203028 : f32
    %508 = vector.broadcast %cst_101 : f32 to vector<2x1xf32>
    %509 = arith.subf %500, %508 : vector<2x1xf32>
    %510 = vector.shape_cast %509 : vector<2x1xf32> to vector<2x1xf32>
    %511 = vector.broadcast %510 : vector<2x1xf32> to vector<2x8xf32>
    %512 = tpu.concatenate %507, %511, %1 in 1 : vector<2x8xf32>, vector<2x8xf32>, vector<2x112xf32> -> vector<2x128xf32>
    %c5_102 = arith.constant 5 : index
    %c0_103 = arith.constant 0 : index
    %c0_104 = arith.constant 0 : index
    %513 = vector.load %arg4[%c5_102, %c0_103, %c0_104] : memref<8x2x128xf32, #tpu.memory_space<vmem>>, vector<1x2x128xf32>
    %514 = vector.shape_cast %513 : vector<1x2x128xf32> to vector<2x128xf32>
    %515 = vector.shape_cast %512 : vector<2x128xf32> to vector<1x2x128xf32>
    tpu.vector_store %arg4[%c5_102, %c0_103, %c0_104], %515 {strides = array<i32>} : memref<8x2x128xf32, #tpu.memory_space<vmem>>, vector<1x2x128xf32>,
    %c6 = arith.constant 6 : index
    %c0_105 = arith.constant 0 : index
    %c0_106 = arith.constant 0 : index
    %c0_107 = arith.constant 0 : index
    %516 = vector.load %arg2[%c6, %c0_105, %c0_106, %c0_107] : memref<8x2x8x128xf32, #tpu.memory_space<vmem>>, vector<1x2x8x128xf32>
    %517 = vector.shape_cast %516 : vector<1x2x8x128xf32> to vector<2x8x128xf32>
    %518 = arith.addf %480, %517 : vector<2x8x128xf32>
    %519 = vector.extract_strided_slice %518 {offsets = [0, 0, 0], sizes = [2, 1, 128], strides = [1, 1, 1]} : vector<2x8x128xf32> to vector<2x1x128xf32>
    %520 = vector.extract_strided_slice %0 {offsets = [0, 0, 0], sizes = [1, 16, 128], strides = [1, 1, 1]} : vector<8x16x128xf32> to vector<1x16x128xf32>
    %521 = vector.broadcast %519 : vector<2x1x128xf32> to vector<2x16x128xf32>
    %522 = vector.broadcast %520 : vector<1x16x128xf32> to vector<2x16x128xf32>
    %523 = arith.mulf %521, %522 : vector<2x16x128xf32>
    %524 = vector.extract_strided_slice %518 {offsets = [0, 1, 0], sizes = [2, 1, 128], strides = [1, 1, 1]} : vector<2x8x128xf32> to vector<2x1x128xf32>
    %525 = vector.extract_strided_slice %0 {offsets = [1, 0, 0], sizes = [1, 16, 128], strides = [1, 1, 1]} : vector<8x16x128xf32> to vector<1x16x128xf32>
    %526 = vector.broadcast %524 : vector<2x1x128xf32> to vector<2x16x128xf32>
    %527 = vector.broadcast %525 : vector<1x16x128xf32> to vector<2x16x128xf32>
    %528 = arith.mulf %526, %527 : vector<2x16x128xf32>
    %529 = arith.addf %523, %528 : vector<2x16x128xf32>
    %530 = vector.extract_strided_slice %518 {offsets = [0, 2, 0], sizes = [2, 1, 128], strides = [1, 1, 1]} : vector<2x8x128xf32> to vector<2x1x128xf32>
    %531 = vector.extract_strided_slice %0 {offsets = [2, 0, 0], sizes = [1, 16, 128], strides = [1, 1, 1]} : vector<8x16x128xf32> to vector<1x16x128xf32>
    %532 = vector.broadcast %530 : vector<2x1x128xf32> to vector<2x16x128xf32>
    %533 = vector.broadcast %531 : vector<1x16x128xf32> to vector<2x16x128xf32>
    %534 = arith.mulf %532, %533 : vector<2x16x128xf32>
    %535 = arith.addf %529, %534 : vector<2x16x128xf32>
    %536 = vector.extract_strided_slice %518 {offsets = [0, 3, 0], sizes = [2, 1, 128], strides = [1, 1, 1]} : vector<2x8x128xf32> to vector<2x1x128xf32>
    %537 = vector.extract_strided_slice %0 {offsets = [3, 0, 0], sizes = [1, 16, 128], strides = [1, 1, 1]} : vector<8x16x128xf32> to vector<1x16x128xf32>
    %538 = vector.broadcast %536 : vector<2x1x128xf32> to vector<2x16x128xf32>
    %539 = vector.broadcast %537 : vector<1x16x128xf32> to vector<2x16x128xf32>
    %540 = arith.mulf %538, %539 : vector<2x16x128xf32>
    %541 = arith.addf %535, %540 : vector<2x16x128xf32>
    %542 = vector.extract_strided_slice %518 {offsets = [0, 4, 0], sizes = [2, 1, 128], strides = [1, 1, 1]} : vector<2x8x128xf32> to vector<2x1x128xf32>
    %543 = vector.extract_strided_slice %0 {offsets = [4, 0, 0], sizes = [1, 16, 128], strides = [1, 1, 1]} : vector<8x16x128xf32> to vector<1x16x128xf32>
    %544 = vector.broadcast %542 : vector<2x1x128xf32> to vector<2x16x128xf32>
    %545 = vector.broadcast %543 : vector<1x16x128xf32> to vector<2x16x128xf32>
    %546 = arith.mulf %544, %545 : vector<2x16x128xf32>
    %547 = arith.addf %541, %546 : vector<2x16x128xf32>
    %548 = vector.extract_strided_slice %518 {offsets = [0, 5, 0], sizes = [2, 1, 128], strides = [1, 1, 1]} : vector<2x8x128xf32> to vector<2x1x128xf32>
    %549 = vector.extract_strided_slice %0 {offsets = [5, 0, 0], sizes = [1, 16, 128], strides = [1, 1, 1]} : vector<8x16x128xf32> to vector<1x16x128xf32>
    %550 = vector.broadcast %548 : vector<2x1x128xf32> to vector<2x16x128xf32>
    %551 = vector.broadcast %549 : vector<1x16x128xf32> to vector<2x16x128xf32>
    %552 = arith.mulf %550, %551 : vector<2x16x128xf32>
    %553 = arith.addf %547, %552 : vector<2x16x128xf32>
    %554 = vector.extract_strided_slice %518 {offsets = [0, 6, 0], sizes = [2, 1, 128], strides = [1, 1, 1]} : vector<2x8x128xf32> to vector<2x1x128xf32>
    %555 = vector.extract_strided_slice %0 {offsets = [6, 0, 0], sizes = [1, 16, 128], strides = [1, 1, 1]} : vector<8x16x128xf32> to vector<1x16x128xf32>
    %556 = vector.broadcast %554 : vector<2x1x128xf32> to vector<2x16x128xf32>
    %557 = vector.broadcast %555 : vector<1x16x128xf32> to vector<2x16x128xf32>
    %558 = arith.mulf %556, %557 : vector<2x16x128xf32>
    %559 = arith.addf %553, %558 : vector<2x16x128xf32>
    %560 = vector.extract_strided_slice %518 {offsets = [0, 7, 0], sizes = [2, 1, 128], strides = [1, 1, 1]} : vector<2x8x128xf32> to vector<2x1x128xf32>
    %561 = vector.extract_strided_slice %0 {offsets = [7, 0, 0], sizes = [1, 16, 128], strides = [1, 1, 1]} : vector<8x16x128xf32> to vector<1x16x128xf32>
    %562 = vector.broadcast %560 : vector<2x1x128xf32> to vector<2x16x128xf32>
    %563 = vector.broadcast %561 : vector<1x16x128xf32> to vector<2x16x128xf32>
    %564 = arith.mulf %562, %563 : vector<2x16x128xf32>
    %565 = arith.addf %559, %564 : vector<2x16x128xf32>
    %566 = vector.extract_strided_slice %565 {offsets = [0, 0, 0], sizes = [2, 8, 128], strides = [1, 1, 1]} : vector<2x16x128xf32> to vector<2x8x128xf32>
    %567 = vector.extract_strided_slice %565 {offsets = [0, 8, 0], sizes = [2, 8, 128], strides = [1, 1, 1]} : vector<2x16x128xf32> to vector<2x8x128xf32>
    %c6_108 = arith.constant 6 : index
    %c0_109 = arith.constant 0 : index
    %c0_110 = arith.constant 0 : index
    %c0_111 = arith.constant 0 : index
    %568 = vector.load %arg1[%c6_108, %c0_109, %c0_110, %c0_111] : memref<8x2x8x128xf32, #tpu.memory_space<vmem>>, vector<1x2x8x128xf32>
    %569 = vector.shape_cast %568 : vector<1x2x8x128xf32> to vector<2x8x128xf32>
    %570 = arith.subf %567, %569 : vector<2x8x128xf32>
    %571 = arith.mulf %570, %570 : vector<2x8x128xf32>
    %cst_112 = arith.constant dense<0.000000e+00> : vector<2x128xf32>
    %572 = vector.multi_reduction <add>, %571, %cst_112 [1] : vector<2x8x128xf32> to vector<2x128xf32>
    %cst_113 = arith.constant -2.500000e-01 : f32
    %573 = vector.broadcast %cst_113 : f32 to vector<2x128xf32>
    %574 = arith.mulf %573, %572 : vector<2x128xf32>
    %cst_114 = arith.constant -10.1240969 : f32
    %575 = vector.broadcast %cst_114 : f32 to vector<2x128xf32>
    %576 = arith.addf %574, %575 : vector<2x128xf32>
    %577 = arith.addf %502, %576 : vector<2x128xf32>
    %cst_115 = arith.constant dense<0xFF800000> : vector<2xf32>
    %578 = vector.multi_reduction <maximumf>, %577, %cst_115 [1] : vector<2x128xf32> to vector<2xf32>
    %579 = vector.shape_cast %578 : vector<2xf32> to vector<2x1xf32>
    %580 = vector.broadcast %579 : vector<2x1xf32> to vector<2x128xf32>
    %581 = arith.subf %577, %580 : vector<2x128xf32>
    %582 = math.exp %581 : vector<2x128xf32>
    %cst_116 = arith.constant dense<0.000000e+00> : vector<2xf32>
    %583 = vector.multi_reduction <add>, %582, %cst_116 [1] : vector<2x128xf32> to vector<2xf32>
    %584 = vector.shape_cast %583 : vector<2xf32> to vector<2x1xf32>
    %585 = math.log %584 : vector<2x1xf32>
    %586 = arith.addf %579, %585 : vector<2x1xf32>
    %587 = vector.broadcast %586 : vector<2x1xf32> to vector<2x128xf32>
    %588 = arith.subf %577, %587 : vector<2x128xf32>
    %589 = math.exp %588 : vector<2x128xf32>
    %590 = vector.shape_cast %589 : vector<2x128xf32> to vector<2x1x128xf32>
    %591 = vector.broadcast %590 : vector<2x1x128xf32> to vector<2x8x128xf32>
    %592 = arith.mulf %591, %518 : vector<2x8x128xf32>
    %cst_117 = arith.constant dense<0.000000e+00> : vector<2x8xf32>
    %593 = vector.multi_reduction <add>, %592, %cst_117 [2] : vector<2x8x128xf32> to vector<2x8xf32>
    %cst_118 = arith.constant 4.85203028 : f32
    %594 = vector.broadcast %cst_118 : f32 to vector<2x1xf32>
    %595 = arith.subf %586, %594 : vector<2x1xf32>
    %596 = vector.shape_cast %595 : vector<2x1xf32> to vector<2x1xf32>
    %597 = vector.broadcast %596 : vector<2x1xf32> to vector<2x8xf32>
    %598 = tpu.concatenate %593, %597, %1 in 1 : vector<2x8xf32>, vector<2x8xf32>, vector<2x112xf32> -> vector<2x128xf32>
    %c6_119 = arith.constant 6 : index
    %c0_120 = arith.constant 0 : index
    %c0_121 = arith.constant 0 : index
    %599 = vector.load %arg4[%c6_119, %c0_120, %c0_121] : memref<8x2x128xf32, #tpu.memory_space<vmem>>, vector<1x2x128xf32>
    %600 = vector.shape_cast %599 : vector<1x2x128xf32> to vector<2x128xf32>
    %601 = vector.shape_cast %598 : vector<2x128xf32> to vector<1x2x128xf32>
    tpu.vector_store %arg4[%c6_119, %c0_120, %c0_121], %601 {strides = array<i32>} : memref<8x2x128xf32, #tpu.memory_space<vmem>>, vector<1x2x128xf32>,
    %c7 = arith.constant 7 : index
    %c0_122 = arith.constant 0 : index
    %c0_123 = arith.constant 0 : index
    %c0_124 = arith.constant 0 : index
    %602 = vector.load %arg2[%c7, %c0_122, %c0_123, %c0_124] : memref<8x2x8x128xf32, #tpu.memory_space<vmem>>, vector<1x2x8x128xf32>
    %603 = vector.shape_cast %602 : vector<1x2x8x128xf32> to vector<2x8x128xf32>
    %604 = arith.addf %566, %603 : vector<2x8x128xf32>
    %605 = vector.extract_strided_slice %604 {offsets = [0, 0, 0], sizes = [2, 1, 128], strides = [1, 1, 1]} : vector<2x8x128xf32> to vector<2x1x128xf32>
    %606 = vector.extract_strided_slice %0 {offsets = [0, 0, 0], sizes = [1, 16, 128], strides = [1, 1, 1]} : vector<8x16x128xf32> to vector<1x16x128xf32>
    %607 = vector.broadcast %605 : vector<2x1x128xf32> to vector<2x16x128xf32>
    %608 = vector.broadcast %606 : vector<1x16x128xf32> to vector<2x16x128xf32>
    %609 = arith.mulf %607, %608 : vector<2x16x128xf32>
    %610 = vector.extract_strided_slice %604 {offsets = [0, 1, 0], sizes = [2, 1, 128], strides = [1, 1, 1]} : vector<2x8x128xf32> to vector<2x1x128xf32>
    %611 = vector.extract_strided_slice %0 {offsets = [1, 0, 0], sizes = [1, 16, 128], strides = [1, 1, 1]} : vector<8x16x128xf32> to vector<1x16x128xf32>
    %612 = vector.broadcast %610 : vector<2x1x128xf32> to vector<2x16x128xf32>
    %613 = vector.broadcast %611 : vector<1x16x128xf32> to vector<2x16x128xf32>
    %614 = arith.mulf %612, %613 : vector<2x16x128xf32>
    %615 = arith.addf %609, %614 : vector<2x16x128xf32>
    %616 = vector.extract_strided_slice %604 {offsets = [0, 2, 0], sizes = [2, 1, 128], strides = [1, 1, 1]} : vector<2x8x128xf32> to vector<2x1x128xf32>
    %617 = vector.extract_strided_slice %0 {offsets = [2, 0, 0], sizes = [1, 16, 128], strides = [1, 1, 1]} : vector<8x16x128xf32> to vector<1x16x128xf32>
    %618 = vector.broadcast %616 : vector<2x1x128xf32> to vector<2x16x128xf32>
    %619 = vector.broadcast %617 : vector<1x16x128xf32> to vector<2x16x128xf32>
    %620 = arith.mulf %618, %619 : vector<2x16x128xf32>
    %621 = arith.addf %615, %620 : vector<2x16x128xf32>
    %622 = vector.extract_strided_slice %604 {offsets = [0, 3, 0], sizes = [2, 1, 128], strides = [1, 1, 1]} : vector<2x8x128xf32> to vector<2x1x128xf32>
    %623 = vector.extract_strided_slice %0 {offsets = [3, 0, 0], sizes = [1, 16, 128], strides = [1, 1, 1]} : vector<8x16x128xf32> to vector<1x16x128xf32>
    %624 = vector.broadcast %622 : vector<2x1x128xf32> to vector<2x16x128xf32>
    %625 = vector.broadcast %623 : vector<1x16x128xf32> to vector<2x16x128xf32>
    %626 = arith.mulf %624, %625 : vector<2x16x128xf32>
    %627 = arith.addf %621, %626 : vector<2x16x128xf32>
    %628 = vector.extract_strided_slice %604 {offsets = [0, 4, 0], sizes = [2, 1, 128], strides = [1, 1, 1]} : vector<2x8x128xf32> to vector<2x1x128xf32>
    %629 = vector.extract_strided_slice %0 {offsets = [4, 0, 0], sizes = [1, 16, 128], strides = [1, 1, 1]} : vector<8x16x128xf32> to vector<1x16x128xf32>
    %630 = vector.broadcast %628 : vector<2x1x128xf32> to vector<2x16x128xf32>
    %631 = vector.broadcast %629 : vector<1x16x128xf32> to vector<2x16x128xf32>
    %632 = arith.mulf %630, %631 : vector<2x16x128xf32>
    %633 = arith.addf %627, %632 : vector<2x16x128xf32>
    %634 = vector.extract_strided_slice %604 {offsets = [0, 5, 0], sizes = [2, 1, 128], strides = [1, 1, 1]} : vector<2x8x128xf32> to vector<2x1x128xf32>
    %635 = vector.extract_strided_slice %0 {offsets = [5, 0, 0], sizes = [1, 16, 128], strides = [1, 1, 1]} : vector<8x16x128xf32> to vector<1x16x128xf32>
    %636 = vector.broadcast %634 : vector<2x1x128xf32> to vector<2x16x128xf32>
    %637 = vector.broadcast %635 : vector<1x16x128xf32> to vector<2x16x128xf32>
    %638 = arith.mulf %636, %637 : vector<2x16x128xf32>
    %639 = arith.addf %633, %638 : vector<2x16x128xf32>
    %640 = vector.extract_strided_slice %604 {offsets = [0, 6, 0], sizes = [2, 1, 128], strides = [1, 1, 1]} : vector<2x8x128xf32> to vector<2x1x128xf32>
    %641 = vector.extract_strided_slice %0 {offsets = [6, 0, 0], sizes = [1, 16, 128], strides = [1, 1, 1]} : vector<8x16x128xf32> to vector<1x16x128xf32>
    %642 = vector.broadcast %640 : vector<2x1x128xf32> to vector<2x16x128xf32>
    %643 = vector.broadcast %641 : vector<1x16x128xf32> to vector<2x16x128xf32>
    %644 = arith.mulf %642, %643 : vector<2x16x128xf32>
    %645 = arith.addf %639, %644 : vector<2x16x128xf32>
    %646 = vector.extract_strided_slice %604 {offsets = [0, 7, 0], sizes = [2, 1, 128], strides = [1, 1, 1]} : vector<2x8x128xf32> to vector<2x1x128xf32>
    %647 = vector.extract_strided_slice %0 {offsets = [7, 0, 0], sizes = [1, 16, 128], strides = [1, 1, 1]} : vector<8x16x128xf32> to vector<1x16x128xf32>
    %648 = vector.broadcast %646 : vector<2x1x128xf32> to vector<2x16x128xf32>
    %649 = vector.broadcast %647 : vector<1x16x128xf32> to vector<2x16x128xf32>
    %650 = arith.mulf %648, %649 : vector<2x16x128xf32>
    %651 = arith.addf %645, %650 : vector<2x16x128xf32>
    %652 = vector.extract_strided_slice %651 {offsets = [0, 8, 0], sizes = [2, 8, 128], strides = [1, 1, 1]} : vector<2x16x128xf32> to vector<2x8x128xf32>
    %c7_125 = arith.constant 7 : index
    %c0_126 = arith.constant 0 : index
    %c0_127 = arith.constant 0 : index
    %c0_128 = arith.constant 0 : index
    %653 = vector.load %arg1[%c7_125, %c0_126, %c0_127, %c0_128] : memref<8x2x8x128xf32, #tpu.memory_space<vmem>>, vector<1x2x8x128xf32>
    %654 = vector.shape_cast %653 : vector<1x2x8x128xf32> to vector<2x8x128xf32>
    %655 = arith.subf %652, %654 : vector<2x8x128xf32>
    %656 = arith.mulf %655, %655 : vector<2x8x128xf32>
    %cst_129 = arith.constant dense<0.000000e+00> : vector<2x128xf32>
    %657 = vector.multi_reduction <add>, %656, %cst_129 [1] : vector<2x8x128xf32> to vector<2x128xf32>
    %cst_130 = arith.constant -2.500000e-01 : f32
    %658 = vector.broadcast %cst_130 : f32 to vector<2x128xf32>
    %659 = arith.mulf %658, %657 : vector<2x128xf32>
    %cst_131 = arith.constant -10.1240969 : f32
    %660 = vector.broadcast %cst_131 : f32 to vector<2x128xf32>
    %661 = arith.addf %659, %660 : vector<2x128xf32>
    %662 = arith.addf %588, %661 : vector<2x128xf32>
    %cst_132 = arith.constant dense<0xFF800000> : vector<2xf32>
    %663 = vector.multi_reduction <maximumf>, %662, %cst_132 [1] : vector<2x128xf32> to vector<2xf32>
    %664 = vector.shape_cast %663 : vector<2xf32> to vector<2x1xf32>
    %665 = vector.broadcast %664 : vector<2x1xf32> to vector<2x128xf32>
    %666 = arith.subf %662, %665 : vector<2x128xf32>
    %667 = math.exp %666 : vector<2x128xf32>
    %cst_133 = arith.constant dense<0.000000e+00> : vector<2xf32>
    %668 = vector.multi_reduction <add>, %667, %cst_133 [1] : vector<2x128xf32> to vector<2xf32>
    %669 = vector.shape_cast %668 : vector<2xf32> to vector<2x1xf32>
    %670 = math.log %669 : vector<2x1xf32>
    %671 = arith.addf %664, %670 : vector<2x1xf32>
    %672 = vector.broadcast %671 : vector<2x1xf32> to vector<2x128xf32>
    %673 = arith.subf %662, %672 : vector<2x128xf32>
    %674 = math.exp %673 : vector<2x128xf32>
    %675 = vector.shape_cast %674 : vector<2x128xf32> to vector<2x1x128xf32>
    %676 = vector.broadcast %675 : vector<2x1x128xf32> to vector<2x8x128xf32>
    %677 = arith.mulf %676, %604 : vector<2x8x128xf32>
    %cst_134 = arith.constant dense<0.000000e+00> : vector<2x8xf32>
    %678 = vector.multi_reduction <add>, %677, %cst_134 [2] : vector<2x8x128xf32> to vector<2x8xf32>
    %cst_135 = arith.constant 4.85203028 : f32
    %679 = vector.broadcast %cst_135 : f32 to vector<2x1xf32>
    %680 = arith.subf %671, %679 : vector<2x1xf32>
    %681 = vector.shape_cast %680 : vector<2x1xf32> to vector<2x1xf32>
    %682 = vector.broadcast %681 : vector<2x1xf32> to vector<2x8xf32>
    %683 = tpu.concatenate %678, %682, %1 in 1 : vector<2x8xf32>, vector<2x8xf32>, vector<2x112xf32> -> vector<2x128xf32>
    %c7_136 = arith.constant 7 : index
    %c0_137 = arith.constant 0 : index
    %c0_138 = arith.constant 0 : index
    %684 = vector.load %arg4[%c7_136, %c0_137, %c0_138] : memref<8x2x128xf32, #tpu.memory_space<vmem>>, vector<1x2x128xf32>
    %685 = vector.shape_cast %684 : vector<1x2x128xf32> to vector<2x128xf32>
    %686 = vector.shape_cast %683 : vector<2x128xf32> to vector<1x2x128xf32>
    tpu.vector_store %arg4[%c7_136, %c0_137, %c0_138], %686 {strides = array<i32>} : memref<8x2x128xf32, #tpu.memory_space<vmem>>, vector<1x2x128xf32>,
    return
  }
  func.func @transform_0(%arg0: i32) -> (i32, i32, i32, i32) {
    %c0_i32 = arith.constant 0 : i32
    %c0_i32_0 = arith.constant 0 : i32
    %c0_i32_1 = arith.constant 0 : i32
    %c0_i32_2 = arith.constant 0 : i32
    %c0_i32_3 = arith.constant 0 : i32
    return %c0_i32, %c0_i32_0, %c0_i32_1, %c0_i32_2 : i32, i32, i32, i32
  }
  func.func @transform_1(%arg0: i32) -> (i32, i32, i32, i32) {
    %c0_i32 = arith.constant 0 : i32
    %c0_i32_0 = arith.constant 0 : i32
    %c0_i32_1 = arith.constant 0 : i32
    %c0_i32_2 = arith.constant 0 : i32
    %c0_i32_3 = arith.constant 0 : i32
    return %c0_i32, %c0_i32_0, %c0_i32_1, %c0_i32_2 : i32, i32, i32, i32
  }
  func.func @transform_2(%arg0: i32) -> (i32, i32, i32) {
    %c0_i32 = arith.constant 0 : i32
    %c0_i32_0 = arith.constant 0 : i32
    %c0_i32_1 = arith.constant 0 : i32
    %c0_i32_2 = arith.constant 0 : i32
    return %c0_i32, %c0_i32_0, %c0_i32_1 : i32, i32, i32
  }
  func.func @transform_3(%arg0: i32) -> (i32, i32, i32) {
    %c0_i32 = arith.constant 0 : i32
    %c0_i32_0 = arith.constant 0 : i32
    %c0_i32_1 = arith.constant 0 : i32
    %c0_i32_2 = arith.constant 0 : i32
    return %c0_i32, %c0_i32_0, %c0_i32_1 : i32, i32, i32
  }
}

</mosaic_0001>

<llo_original>
// kernel: sis_filter.1
$region0: #{sis_filter.1}
  #allocation0 [shape = 'u32[]', space=smem, size = 0x4, offset = 0x4, fixed_abs, tag = 'smem constant byte address 0x4 - core index']
  #allocation1 [shape = 'u32[144,128]{1,0:T(1,128)}', space=vmem, size = 0x12000, scoped, tag = 'internal scratch']
  %s0 = inlined_call_operand.vmem [shape: f32[8,2,8,128], index: 0, kind: input, shape index: {}]
  %s1 = inlined_call_operand.vmem [shape: f32[8,2,8,128], index: 1, kind: input, shape index: {}]
  %s2 = inlined_call_operand.vmem [shape: f32[8,16,128], index: 2, kind: input, shape index: {}]
  %s3 = inlined_call_operand.vmem [shape: f32[8,2,128], index: 3, kind: output, shape index: {}]
  %s4 = sld [smem:[#allocation0]]
  $region22: #{sis_filter.1} parent=0
    _
  %s6 = ssub.s32 1, %s4
  %s7 = scalar_select 0, %s6, %s4
  // Predicated region
  $region2: #{sis_filter.1} parent=0 // pred_check
    _
  $region3: #{sis_filter.1} parent=0 // pred_check_branch
    %9 = sbr.rel (0) target = $region5
  $region4: #{sis_filter.1} parent=0 // pred_region
    _
  $region5: #{sis_filter.1} parent=0 // pred_fallthru
    _
  // Predicated region
  $region6: #{sis_filter.1} parent=0 // pred_check
    _
  $region7: #{sis_filter.1} parent=0 // pred_check_branch
    %11 = sbr.rel (0) target = $region9
  $region8: #{sis_filter.1} parent=0 // pred_region
    _
  $region9: #{sis_filter.1} parent=0 // pred_fallthru
    _
  // Predicated region
  $region10: #{sis_filter.1} parent=0 // pred_check
    _
  $region11: #{sis_filter.1} parent=0 // pred_check_branch
    %13 = sbr.rel (0) target = $region13
  $region12: #{sis_filter.1} parent=0 // pred_region
    _
  $region13: #{sis_filter.1} parent=0 // pred_fallthru
    _
  %v14 = vld [vmem:[%s2] sm:$0xff]
  %v15 = vld [vmem:[%s2 + $0x8] sm:$0xff]
  %v16 = vld [vmem:[%s2 + $0x10] sm:$0xff]
  %v17 = vld [vmem:[%s2 + $0x18] sm:$0xff]
  %v18 = vld [vmem:[%s2 + $0x20] sm:$0xff]
  %v19 = vld [vmem:[%s2 + $0x28] sm:$0xff]
  %v20 = vld [vmem:[%s2 + $0x30] sm:$0xff]
  %v21 = vld [vmem:[%s2 + $0x38] sm:$0xff]
  %v22 = vld [vmem:[%s2 + $0x40] sm:$0xff]
  %v23 = vld [vmem:[%s2 + $0x48] sm:$0xff]
  %v24 = vld [vmem:[%s2 + $0x50] sm:$0xff]
  %v25 = vld [vmem:[%s2 + $0x58] sm:$0xff]
  %v26 = vld [vmem:[%s2 + $0x60] sm:$0xff]
  %v27 = vld [vmem:[%s2 + $0x68] sm:$0xff]
  %v28 = vld [vmem:[%s2 + $0x70] sm:$0xff]
  %v29 = vld [vmem:[%s2 + $0x78] sm:$0xff]
  %v30 = vld [vmem:[%s1] sm:$0xff]
  %v31 = vld [vmem:[%s1 + $0x8] sm:$0xff]
  %v32 = vlaneseq
  %v33 = vshrl.u32 %v32, 7
  %v34 = vsub.s32 0, %v33
  %v35 = vrot.slane %v30, %v34
  %v36 = vlaneseq
  %v37 = vshrl.u32 %v36, 7
  %v38 = vsub.s32 0, %v37
  %v39 = vrot.slane %v31, %v38
  %v40 = vmul.f32 %v35, %v14
  %v41 = vmul.f32 %v35, %v15
  %v42 = vmul.f32 %v39, %v14
  %v43 = vmul.f32 %v39, %v15
  %v44 = vlaneseq
  %v45 = vshrl.u32 %v44, 7
  %v46 = vsub.s32 1, %v45
  %v47 = vrot.slane %v30, %v46
  %v48 = vlaneseq
  %v49 = vshrl.u32 %v48, 7
  %v50 = vsub.s32 1, %v49
  %v51 = vrot.slane %v31, %v50
  %v52 = vmul.f32 %v47, %v16
  %v53 = vmul.f32 %v47, %v17
  %v54 = vmul.f32 %v51, %v16
  %v55 = vmul.f32 %v51, %v17
  %v56 = vadd.f32 %v40, %v52
  %v57 = vadd.f32 %v41, %v53
  %v58 = vadd.f32 %v42, %v54
  %v59 = vadd.f32 %v43, %v55
  %v60 = vlaneseq
  %v61 = vshrl.u32 %v60, 7
  %v62 = vsub.s32 2, %v61
  %v63 = vrot.slane %v30, %v62
  %v64 = vlaneseq
  %v65 = vshrl.u32 %v64, 7
  %v66 = vsub.s32 2, %v65
  %v67 = vrot.slane %v31, %v66
  %v68 = vmul.f32 %v63, %v18
  %v69 = vmul.f32 %v63, %v19
  %v70 = vmul.f32 %v67, %v18
  %v71 = vmul.f32 %v67, %v19
  %v72 = vadd.f32 %v56, %v68
  %v73 = vadd.f32 %v57, %v69
  %v74 = vadd.f32 %v58, %v70
  %v75 = vadd.f32 %v59, %v71
  %v76 = vlaneseq
  %v77 = vshrl.u32 %v76, 7
  %v78 = vsub.s32 3, %v77
  %v79 = vrot.slane %v30, %v78
  %v80 = vlaneseq
  %v81 = vshrl.u32 %v80, 7
  %v82 = vsub.s32 3, %v81
  %v83 = vrot.slane %v31, %v82
  %v84 = vmul.f32 %v79, %v20
  %v85 = vmul.f32 %v79, %v21
  %v86 = vmul.f32 %v83, %v20
  %v87 = vmul.f32 %v83, %v21
  %v88 = vadd.f32 %v72, %v84
  %v89 = vadd.f32 %v73, %v85
  %v90 = vadd.f32 %v74, %v86
  %v91 = vadd.f32 %v75, %v87
  %v92 = vlaneseq
  %v93 = vshrl.u32 %v92, 7
  %v94 = vsub.s32 4, %v93
  %v95 = vrot.slane %v30, %v94
  %v96 = vlaneseq
  %v97 = vshrl.u32 %v96, 7
  %v98 = vsub.s32 4, %v97
  %v99 = vrot.slane %v31, %v98
  %v100 = vmul.f32 %v95, %v22
  %v101 = vmul.f32 %v95, %v23
  %v102 = vmul.f32 %v99, %v22
  %v103 = vmul.f32 %v99, %v23
  %v104 = vadd.f32 %v88, %v100
  %v105 = vadd.f32 %v89, %v101
  %v106 = vadd.f32 %v90, %v102
  %v107 = vadd.f32 %v91, %v103
  %v108 = vlaneseq
  %v109 = vshrl.u32 %v108, 7
  %v110 = vsub.s32 5, %v109
  %v111 = vrot.slane %v30, %v110
  %v112 = vlaneseq
  %v113 = vshrl.u32 %v112, 7
  %v114 = vsub.s32 5, %v113
  %v115 = vrot.slane %v31, %v114
  %v116 = vmul.f32 %v111, %v24
  %v117 = vmul.f32 %v111, %v25
  %v118 = vmul.f32 %v115, %v24
  %v119 = vmul.f32 %v115, %v25
  %v120 = vadd.f32 %v104, %v116
  %v121 = vadd.f32 %v105, %v117
  %v122 = vadd.f32 %v106, %v118
  %v123 = vadd.f32 %v107, %v119
  %v124 = vlaneseq
  %v125 = vshrl.u32 %v124, 7
  %v126 = vsub.s32 6, %v125
  %v127 = vrot.slane %v30, %v126
  %v128 = vlaneseq
  %v129 = vshrl.u32 %v128, 7
  %v130 = vsub.s32 6, %v129
  %v131 = vrot.slane %v31, %v130
  %v132 = vmul.f32 %v127, %v26
  %v133 = vmul.f32 %v127, %v27
  %v134 = vmul.f32 %v131, %v26
  %v135 = vmul.f32 %v131, %v27
  %v136 = vadd.f32 %v120, %v132
  %v137 = vadd.f32 %v121, %v133
  %v138 = vadd.f32 %v122, %v134
  %v139 = vadd.f32 %v123, %v135
  %v140 = vlaneseq
  %v141 = vshrl.u32 %v140, 7
  %v142 = vsub.s32 7, %v141
  %v143 = vrot.slane %v30, %v142
  %v144 = vlaneseq
  %v145 = vshrl.u32 %v144, 7
  %v146 = vsub.s32 7, %v145
  %v147 = vrot.slane %v31, %v146
  %v148 = vmul.f32 %v143, %v28
  %v149 = vmul.f32 %v143, %v29
  %v150 = vmul.f32 %v147, %v28
  %v151 = vmul.f32 %v147, %v29
  %v152 = vadd.f32 %v136, %v148
  %v153 = vadd.f32 %v137, %v149
  %v154 = vadd.f32 %v138, %v150
  %v155 = vadd.f32 %v139, %v151
  %v156 = vld [vmem:[%s0] sm:$0xff]
  %v157 = vld [vmem:[%s0 + $0x8] sm:$0xff]
  %v158 = vsub.f32 %v153, %v156
  %v159 = vsub.f32 %v155, %v157
  %v160 = vmul.f32 %v158, %v158
  %v161 = vmul.f32 %v159, %v159
  %v162 = vrot.slane %v160, 4
  %v163 = vadd.f32 %v160, %v162
  %v164 = vrot.slane %v163, 2
  %v165 = vadd.f32 %v163, %v164
  %v166 = vrot.slane %v165, 1
  %v167 = vadd.f32 %v165, %v166
  %v168 = vrot.slane %v161, 4
  %v169 = vadd.f32 %v161, %v168
  %v170 = vrot.slane %v169, 2
  %v171 = vadd.f32 %v169, %v170
  %v172 = vrot.slane %v171, 1
  %v173 = vadd.f32 %v171, %v172
  %v174 = vmul.f32 %v167, -0.25
  %v175 = vmul.f32 %v173, -0.25
  %v176 = vadd.f32 %v174, -10.124097
  %v177 = vadd.f32 %v175, -10.124097
  %vm180 = vcmask 1041409
  %v181 = vsel %vm180, %v177, %v176
  %vm183 = vcmask 1041408
  %v184 = vsel %vm183, %v181, -inf
  %185 = vmax.xlane.f32.xlu0 %v184
  %v186 = vpop.xlane.xlu0 %185
  %v188 = vrot.slane %v186, 1
  %v191 = vsub.f32 %v176, %v186
  %v192 = vsub.f32 %v177, %v188
  %v193 = vmul.f32 %v191, 1.442695
  %v194 = vpow.pop %v193
  %v195 = vmul.f32 %v192, 1.442695
  %v196 = vpow.pop %v195
  %v199 = vrot.slane %v196, 7
  %v200 = vsel %vm180, %v199, %v194
  %v202 = vsel %vm183, %v200, 0.0
  %203 = vadd.xlane.f32.xlu0 %v202
  %v204 = vpop.xlane.xlu0 %203
  %v205 = vlog2.pop %v204
  %v206 = vmul.f32 %v205, 0.6931472
  %v207 = vadd.f32 %v186, %v206
  %v209 = vrot.slane %v207, 1
  %v212 = vsub.f32 %v176, %v207
  %v213 = vsub.f32 %v177, %v209
  %v214 = vmul.f32 %v212, 1.442695
  %v215 = vpow.pop %v214
  %v216 = vmul.f32 %v213, 1.442695
  %v217 = vpow.pop %v216
  %v218 = vlaneseq
  %v219 = vshrl.u32 %v218, 7
  %v220 = vsub.s32 0, %v219
  %v221 = vrot.slane %v215, %v220
  %v222 = vlaneseq
  %v223 = vshrl.u32 %v222, 7
  %v224 = vsub.s32 0, %v223
  %v225 = vrot.slane %v217, %v224
  %v226 = vmul.f32 %v221, %v30
  %v227 = vmul.f32 %v225, %v31
  %228 = vadd.xlane.f32.xlu0 %v226
  %v229 = vpop.xlane.xlu0 %228
  %230 = vadd.xlane.f32.xlu0 %v227
  %v231 = vpop.xlane.xlu0 %230
  %v232 = vsub.f32 %v207, 4.8520303
  %v235 = vlaneseq
  %v236 = vand.u32 %v235, 127
  %v237 = vlaneseq
  %v238 = vshrl.u32 %v237, 7
  %v239 = vsub.s32 %v236, %v238
  %v240 = vrot.slane %v229, %v239
  %v241 = vlaneseq
  %v242 = vshrl.u32 %v241, 7
  %v243 = vsub.s32 %v236, %v242
  %v244 = vrot.slane %v231, %v243
  %v245 = vsel %vm180, %v244, %v240
  %vm247 = vcmask 64512
  %v248 = vsel %vm247, %v245, %v232
  %vm249 = vcmask 130048
  %v250 = vsel %vm249, %v248, 0.0
  %251 = vst [vmem:[%s3] sm:$0x3] %v250
  %s252 = scalar_lea.vmem %s1, 16
  %v253 = vld [vmem:[%s252] sm:$0xff]
  %v254 = vld [vmem:[%s252 + $0x8] sm:$0xff]
  %v255 = vadd.f32 %v152, %v253
  %v256 = vadd.f32 %v154, %v254
  %v257 = vlaneseq
  %v258 = vshrl.u32 %v257, 7
  %v259 = vsub.s32 0, %v258
  %v260 = vrot.slane %v255, %v259
  %v261 = vlaneseq
  %v262 = vshrl.u32 %v261, 7
  %v263 = vsub.s32 0, %v262
  %v264 = vrot.slane %v256, %v263
  %v265 = vmul.f32 %v260, %v14
  %v266 = vmul.f32 %v260, %v15
  %v267 = vmul.f32 %v264, %v14
  %v268 = vmul.f32 %v264, %v15
  %v269 = vlaneseq
  %v270 = vshrl.u32 %v269, 7
  %v271 = vsub.s32 1, %v270
  %v272 = vrot.slane %v255, %v271
  %v273 = vlaneseq
  %v274 = vshrl.u32 %v273, 7
  %v275 = vsub.s32 1, %v274
  %v276 = vrot.slane %v256, %v275
  %v277 = vmul.f32 %v272, %v16
  %v278 = vmul.f32 %v272, %v17
  %v279 = vmul.f32 %v276, %v16
  %v280 = vmul.f32 %v276, %v17
  %v281 = vadd.f32 %v265, %v277
  %v282 = vadd.f32 %v266, %v278
  %v283 = vadd.f32 %v267, %v279
  %v284 = vadd.f32 %v268, %v280
  %v285 = vlaneseq
  %v286 = vshrl.u32 %v285, 7
  %v287 = vsub.s32 2, %v286
  %v288 = vrot.slane %v255, %v287
  %v289 = vlaneseq
  %v290 = vshrl.u32 %v289, 7
  %v291 = vsub.s32 2, %v290
  %v292 = vrot.slane %v256, %v291
  %v293 = vmul.f32 %v288, %v18
  %v294 = vmul.f32 %v288, %v19
  %v295 = vmul.f32 %v292, %v18
  %v296 = vmul.f32 %v292, %v19
  %v297 = vadd.f32 %v281, %v293
  %v298 = vadd.f32 %v282, %v294
  %v299 = vadd.f32 %v283, %v295
  %v300 = vadd.f32 %v284, %v296
  %v301 = vlaneseq
  %v302 = vshrl.u32 %v301, 7
  %v303 = vsub.s32 3, %v302
  %v304 = vrot.slane %v255, %v303
  %v305 = vlaneseq
  %v306 = vshrl.u32 %v305, 7
  %v307 = vsub.s32 3, %v306
  %v308 = vrot.slane %v256, %v307
  %v309 = vmul.f32 %v304, %v20
  %v310 = vmul.f32 %v304, %v21
  %v311 = vmul.f32 %v308, %v20
  %v312 = vmul.f32 %v308, %v21
  %v313 = vadd.f32 %v297, %v309
  %v314 = vadd.f32 %v298, %v310
  %v315 = vadd.f32 %v299, %v311
  %v316 = vadd.f32 %v300, %v312
  %v317 = vlaneseq
  %v318 = vshrl.u32 %v317, 7
  %v319 = vsub.s32 4, %v318
  %v320 = vrot.slane %v255, %v319
  %v321 = vlaneseq
  %v322 = vshrl.u32 %v321, 7
  %v323 = vsub.s32 4, %v322
  %v324 = vrot.slane %v256, %v323
  %v325 = vmul.f32 %v320, %v22
  %v326 = vmul.f32 %v320, %v23
  %v327 = vmul.f32 %v324, %v22
  %v328 = vmul.f32 %v324, %v23
  %v329 = vadd.f32 %v313, %v325
  %v330 = vadd.f32 %v314, %v326
  %v331 = vadd.f32 %v315, %v327
  %v332 = vadd.f32 %v316, %v328
  %v333 = vlaneseq
  %v334 = vshrl.u32 %v333, 7
  %v335 = vsub.s32 5, %v334
  %v336 = vrot.slane %v255, %v335
  %v337 = vlaneseq
  %v338 = vshrl.u32 %v337, 7
  %v339 = vsub.s32 5, %v338
  %v340 = vrot.slane %v256, %v339
  %v341 = vmul.f32 %v336, %v24
  %v342 = vmul.f32 %v336, %v25
  %v343 = vmul.f32 %v340, %v24
  %v344 = vmul.f32 %v340, %v25
  %v345 = vadd.f32 %v329, %v341
  %v346 = vadd.f32 %v330, %v342
  %v347 = vadd.f32 %v331, %v343
  %v348 = vadd.f32 %v332, %v344
  %v349 = vlaneseq
  %v350 = vshrl.u32 %v349, 7
  %v351 = vsub.s32 6, %v350
  %v352 = vrot.slane %v255, %v351
  %v353 = vlaneseq
  %v354 = vshrl.u32 %v353, 7
  %v355 = vsub.s32 6, %v354
  %v356 = vrot.slane %v256, %v355
  %v357 = vmul.f32 %v352, %v26
  %v358 = vmul.f32 %v352, %v27
  %v359 = vmul.f32 %v356, %v26
  %v360 = vmul.f32 %v356, %v27
  %v361 = vadd.f32 %v345, %v357
  %v362 = vadd.f32 %v346, %v358
  %v363 = vadd.f32 %v347, %v359
  %v364 = vadd.f32 %v348, %v360
  %v365 = vlaneseq
  %v366 = vshrl.u32 %v365, 7
  %v367 = vsub.s32 7, %v366
  %v368 = vrot.slane %v255, %v367
  %v369 = vlaneseq
  %v370 = vshrl.u32 %v369, 7
  %v371 = vsub.s32 7, %v370
  %v372 = vrot.slane %v256, %v371
  %v373 = vmul.f32 %v368, %v28
  %v374 = vmul.f32 %v368, %v29
  %v375 = vmul.f32 %v372, %v28
  %v376 = vmul.f32 %v372, %v29
  %v377 = vadd.f32 %v361, %v373
  %v378 = vadd.f32 %v362, %v374
  %v379 = vadd.f32 %v363, %v375
  %v380 = vadd.f32 %v364, %v376
  %s381 = scalar_lea.vmem %s0, 16
  %v382 = vld [vmem:[%s381] sm:$0xff]
  %v383 = vld [vmem:[%s381 + $0x8] sm:$0xff]
  %v384 = vsub.f32 %v378, %v382
  %v385 = vsub.f32 %v380, %v383
  %v386 = vmul.f32 %v384, %v384
  %v387 = vmul.f32 %v385, %v385
  %v388 = vrot.slane %v386, 4
  %v389 = vadd.f32 %v386, %v388
  %v390 = vrot.slane %v389, 2
  %v391 = vadd.f32 %v389, %v390
  %v392 = vrot.slane %v391, 1
  %v393 = vadd.f32 %v391, %v392
  %v394 = vrot.slane %v387, 4
  %v395 = vadd.f32 %v387, %v394
  %v396 = vrot.slane %v395, 2
  %v397 = vadd.f32 %v395, %v396
  %v398 = vrot.slane %v397, 1
  %v399 = vadd.f32 %v397, %v398
  %v400 = vmul.f32 %v393, -0.25
  %v401 = vmul.f32 %v399, -0.25
  %v402 = vadd.f32 %v400, -10.124097
  %v403 = vadd.f32 %v401, -10.124097
  %v404 = vadd.f32 %v212, %v402
  %v405 = vadd.f32 %v213, %v403
  %v408 = vrot.slane %v405, 7
  %v409 = vsel %vm180, %v408, %v404
  %v411 = vsel %vm183, %v409, -inf
  %412 = vmax.xlane.f32.xlu0 %v411
  %v413 = vpop.xlane.xlu0 %412
  %v415 = vrot.slane %v413, 1
  %v418 = vsub.f32 %v404, %v413
  %v419 = vsub.f32 %v405, %v415
  %v420 = vmul.f32 %v418, 1.442695
  %v421 = vpow.pop %v420
  %v422 = vmul.f32 %v419, 1.442695
  %v423 = vpow.pop %v422
  %v426 = vrot.slane %v423, 7
  %v427 = vsel %vm180, %v426, %v421
  %v429 = vsel %vm183, %v427, 0.0
  %430 = vadd.xlane.f32.xlu0 %v429
  %v431 = vpop.xlane.xlu0 %430
  %v432 = vlog2.pop %v431
  %v433 = vmul.f32 %v432, 0.6931472
  %v434 = vadd.f32 %v413, %v433
  %v436 = vrot.slane %v434, 1
  %v439 = vsub.f32 %v404, %v434
  %v440 = vsub.f32 %v405, %v436
  %v441 = vmul.f32 %v439, 1.442695
  %v442 = vpow.pop %v441
  %v443 = vmul.f32 %v440, 1.442695
  %v444 = vpow.pop %v443
  %v445 = vlaneseq
  %v446 = vshrl.u32 %v445, 7
  %v447 = vsub.s32 0, %v446
  %v448 = vrot.slane %v442, %v447
  %v449 = vlaneseq
  %v450 = vshrl.u32 %v449, 7
  %v451 = vsub.s32 0, %v450
  %v452 = vrot.slane %v444, %v451
  %v453 = vmul.f32 %v448, %v255
  %v454 = vmul.f32 %v452, %v256
  %455 = vadd.xlane.f32.xlu0 %v453
  %v456 = vpop.xlane.xlu0 %455
  %457 = vadd.xlane.f32.xlu0 %v454
  %v458 = vpop.xlane.xlu0 %457
  %v459 = vsub.f32 %v434, 4.8520303
  %v462 = vlaneseq
  %v463 = vshrl.u32 %v462, 7
  %v464 = vsub.s32 %v236, %v463
  %v465 = vrot.slane %v456, %v464
  %v466 = vlaneseq
  %v467 = vshrl.u32 %v466, 7
  %v468 = vsub.s32 %v236, %v467
  %v469 = vrot.slane %v458, %v468
  %v470 = vsel %vm180, %v469, %v465
  %v472 = vsel %vm247, %v470, %v459
  %v473 = vsel %vm249, %v472, 0.0
  %s474 = scalar_lea.vmem %s3, 2
  %475 = vst [vmem:[%s474] sm:$0x3] %v473
  %s476 = scalar_lea.vmem %s1, 32
  %v477 = vld [vmem:[%s476] sm:$0xff]
  %v478 = vld [vmem:[%s476 + $0x8] sm:$0xff]
  %v479 = vadd.f32 %v377, %v477
  %v480 = vadd.f32 %v379, %v478
  %v481 = vlaneseq
  %v482 = vshrl.u32 %v481, 7
  %v483 = vsub.s32 0, %v482
  %v484 = vrot.slane %v479, %v483
  %v485 = vlaneseq
  %v486 = vshrl.u32 %v485, 7
  %v487 = vsub.s32 0, %v486
  %v488 = vrot.slane %v480, %v487
  %v489 = vmul.f32 %v484, %v14
  %v490 = vmul.f32 %v484, %v15
  %v491 = vmul.f32 %v488, %v14
  %v492 = vmul.f32 %v488, %v15
  %v493 = vlaneseq
  %v494 = vshrl.u32 %v493, 7
  %v495 = vsub.s32 1, %v494
  %v496 = vrot.slane %v479, %v495
  %v497 = vlaneseq
  %v498 = vshrl.u32 %v497, 7
  %v499 = vsub.s32 1, %v498
  %v500 = vrot.slane %v480, %v499
  %v501 = vmul.f32 %v496, %v16
  %v502 = vmul.f32 %v496, %v17
  %v503 = vmul.f32 %v500, %v16
  %v504 = vmul.f32 %v500, %v17
  %v505 = vadd.f32 %v489, %v501
  %v506 = vadd.f32 %v490, %v502
  %v507 = vadd.f32 %v491, %v503
  %v508 = vadd.f32 %v492, %v504
  %v509 = vlaneseq
  %v510 = vshrl.u32 %v509, 7
  %v511 = vsub.s32 2, %v510
  %v512 = vrot.slane %v479, %v511
  %v513 = vlaneseq
  %v514 = vshrl.u32 %v513, 7
  %v515 = vsub.s32 2, %v514
  %v516 = vrot.slane %v480, %v515
  %v517 = vmul.f32 %v512, %v18
  %v518 = vmul.f32 %v512, %v19
  %v519 = vmul.f32 %v516, %v18
  %v520 = vmul.f32 %v516, %v19
  %v521 = vadd.f32 %v505, %v517
  %v522 = vadd.f32 %v506, %v518
  %v523 = vadd.f32 %v507, %v519
  %v524 = vadd.f32 %v508, %v520
  %v525 = vlaneseq
  %v526 = vshrl.u32 %v525, 7
  %v527 = vsub.s32 3, %v526
  %v528 = vrot.slane %v479, %v527
  %v529 = vlaneseq
  %v530 = vshrl.u32 %v529, 7
  %v531 = vsub.s32 3, %v530
  %v532 = vrot.slane %v480, %v531
  %v533 = vmul.f32 %v528, %v20
  %v534 = vmul.f32 %v528, %v21
  %v535 = vmul.f32 %v532, %v20
  %v536 = vmul.f32 %v532, %v21
  %v537 = vadd.f32 %v521, %v533
  %v538 = vadd.f32 %v522, %v534
  %v539 = vadd.f32 %v523, %v535
  %v540 = vadd.f32 %v524, %v536
  %v541 = vlaneseq
  %v542 = vshrl.u32 %v541, 7
  %v543 = vsub.s32 4, %v542
  %v544 = vrot.slane %v479, %v543
  %v545 = vlaneseq
  %v546 = vshrl.u32 %v545, 7
  %v547 = vsub.s32 4, %v546
  %v548 = vrot.slane %v480, %v547
  %v549 = vmul.f32 %v544, %v22
  %v550 = vmul.f32 %v544, %v23
  %v551 = vmul.f32 %v548, %v22
  %v552 = vmul.f32 %v548, %v23
  %v553 = vadd.f32 %v537, %v549
  %v554 = vadd.f32 %v538, %v550
  %v555 = vadd.f32 %v539, %v551
  %v556 = vadd.f32 %v540, %v552
  %v557 = vlaneseq
  %v558 = vshrl.u32 %v557, 7
  %v559 = vsub.s32 5, %v558
  %v560 = vrot.slane %v479, %v559
  %v561 = vlaneseq
  %v562 = vshrl.u32 %v561, 7
  %v563 = vsub.s32 5, %v562
  %v564 = vrot.slane %v480, %v563
  %v565 = vmul.f32 %v560, %v24
  %v566 = vmul.f32 %v560, %v25
  %v567 = vmul.f32 %v564, %v24
  %v568 = vmul.f32 %v564, %v25
  %v569 = vadd.f32 %v553, %v565
  %v570 = vadd.f32 %v554, %v566
  %v571 = vadd.f32 %v555, %v567
  %v572 = vadd.f32 %v556, %v568
  %v573 = vlaneseq
  %v574 = vshrl.u32 %v573, 7
  %v575 = vsub.s32 6, %v574
  %v576 = vrot.slane %v479, %v575
  %v577 = vlaneseq
  %v578 = vshrl.u32 %v577, 7
  %v579 = vsub.s32 6, %v578
  %v580 = vrot.slane %v480, %v579
  %v581 = vmul.f32 %v576, %v26
  %v582 = vmul.f32 %v576, %v27
  %v583 = vmul.f32 %v580, %v26
  %v584 = vmul.f32 %v580, %v27
  %v585 = vadd.f32 %v569, %v581
  %v586 = vadd.f32 %v570, %v582
  %v587 = vadd.f32 %v571, %v583
  %v588 = vadd.f32 %v572, %v584
  %v589 = vlaneseq
  %v590 = vshrl.u32 %v589, 7
  %v591 = vsub.s32 7, %v590
  %v592 = vrot.slane %v479, %v591
  %v593 = vlaneseq
  %v594 = vshrl.u32 %v593, 7
  %v595 = vsub.s32 7, %v594
  %v596 = vrot.slane %v480, %v595
  %v597 = vmul.f32 %v592, %v28
  %v598 = vmul.f32 %v592, %v29
  %v599 = vmul.f32 %v596, %v28
  %v600 = vmul.f32 %v596, %v29
  %v601 = vadd.f32 %v585, %v597
  %v602 = vadd.f32 %v586, %v598
  %v603 = vadd.f32 %v587, %v599
  %v604 = vadd.f32 %v588, %v600
  %s605 = scalar_lea.vmem %s0, 32
  %v606 = vld [vmem:[%s605] sm:$0xff]
  %v607 = vld [vmem:[%s605 + $0x8] sm:$0xff]
  %v608 = vsub.f32 %v602, %v606
  %v609 = vsub.f32 %v604, %v607
  %v610 = vmul.f32 %v608, %v608
  %v611 = vmul.f32 %v609, %v609
  %v612 = vrot.slane %v610, 4
  %v613 = vadd.f32 %v610, %v612
  %v614 = vrot.slane %v613, 2
  %v615 = vadd.f32 %v613, %v614
  %v616 = vrot.slane %v615, 1
  %v617 = vadd.f32 %v615, %v616
  %v618 = vrot.slane %v611, 4
  %v619 = vadd.f32 %v611, %v618
  %v620 = vrot.slane %v619, 2
  %v621 = vadd.f32 %v619, %v620
  %v622 = vrot.slane %v621, 1
  %v623 = vadd.f32 %v621, %v622
  %v624 = vmul.f32 %v617, -0.25
  %v625 = vmul.f32 %v623, -0.25
  %v626 = vadd.f32 %v624, -10.124097
  %v627 = vadd.f32 %v625, -10.124097
  %v628 = vadd.f32 %v439, %v626
  %v629 = vadd.f32 %v440, %v627
  %v632 = vrot.slane %v629, 7
  %v633 = vsel %vm180, %v632, %v628
  %v635 = vsel %vm183, %v633, -inf
  %636 = vmax.xlane.f32.xlu0 %v635
  %v637 = vpop.xlane.xlu0 %636
  %v639 = vrot.slane %v637, 1
  %v642 = vsub.f32 %v628, %v637
  %v643 = vsub.f32 %v629, %v639
  %v644 = vmul.f32 %v642, 1.442695
  %v645 = vpow.pop %v644
  %v646 = vmul.f32 %v643, 1.442695
  %v647 = vpow.pop %v646
  %v650 = vrot.slane %v647, 7
  %v651 = vsel %vm180, %v650, %v645
  %v653 = vsel %vm183, %v651, 0.0
  %654 = vadd.xlane.f32.xlu0 %v653
  %v655 = vpop.xlane.xlu0 %654
  %v656 = vlog2.pop %v655
  %v657 = vmul.f32 %v656, 0.6931472
  %v658 = vadd.f32 %v637, %v657
  %v660 = vrot.slane %v658, 1
  %v663 = vsub.f32 %v628, %v658
  %v664 = vsub.f32 %v629, %v660
  %v665 = vmul.f32 %v663, 1.442695
  %v666 = vpow.pop %v665
  %v667 = vmul.f32 %v664, 1.442695
  %v668 = vpow.pop %v667
  %v669 = vlaneseq
  %v670 = vshrl.u32 %v669, 7
  %v671 = vsub.s32 0, %v670
  %v672 = vrot.slane %v666, %v671
  %v673 = vlaneseq
  %v674 = vshrl.u32 %v673, 7
  %v675 = vsub.s32 0, %v674
  %v676 = vrot.slane %v668, %v675
  %v677 = vmul.f32 %v672, %v479
  %v678 = vmul.f32 %v676, %v480
  %679 = vadd.xlane.f32.xlu0 %v677
  %v680 = vpop.xlane.xlu0 %679
  %681 = vadd.xlane.f32.xlu0 %v678
  %v682 = vpop.xlane.xlu0 %681
  %v683 = vsub.f32 %v658, 4.8520303
  %v686 = vlaneseq
  %v687 = vshrl.u32 %v686, 7
  %v688 = vsub.s32 %v236, %v687
  %v689 = vrot.slane %v680, %v688
  %v690 = vlaneseq
  %v691 = vshrl.u32 %v690, 7
  %v692 = vsub.s32 %v236, %v691
  %v693 = vrot.slane %v682, %v692
  %v694 = vsel %vm180, %v693, %v689
  %v696 = vsel %vm247, %v694, %v683
  %v697 = vsel %vm249, %v696, 0.0
  %s698 = scalar_lea.vmem %s3, 4
  %699 = vst [vmem:[%s698] sm:$0x3] %v697
  %s700 = scalar_lea.vmem %s1, 48
  %v701 = vld [vmem:[%s700] sm:$0xff]
  %v702 = vld [vmem:[%s700 + $0x8] sm:$0xff]
  %v703 = vadd.f32 %v601, %v701
  %v704 = vadd.f32 %v603, %v702
  %v705 = vlaneseq
  %v706 = vshrl.u32 %v705, 7
  %v707 = vsub.s32 0, %v706
  %v708 = vrot.slane %v703, %v707
  %v709 = vlaneseq
  %v710 = vshrl.u32 %v709, 7
  %v711 = vsub.s32 0, %v710
  %v712 = vrot.slane %v704, %v711
  %v713 = vmul.f32 %v708, %v14
  %v714 = vmul.f32 %v708, %v15
  %v715 = vmul.f32 %v712, %v14
  %v716 = vmul.f32 %v712, %v15
  %v717 = vlaneseq
  %v718 = vshrl.u32 %v717, 7
  %v719 = vsub.s32 1, %v718
  %v720 = vrot.slane %v703, %v719
  %v721 = vlaneseq
  %v722 = vshrl.u32 %v721, 7
  %v723 = vsub.s32 1, %v722
  %v724 = vrot.slane %v704, %v723
  %v725 = vmul.f32 %v720, %v16
  %v726 = vmul.f32 %v720, %v17
  %v727 = vmul.f32 %v724, %v16
  %v728 = vmul.f32 %v724, %v17
  %v729 = vadd.f32 %v713, %v725
  %v730 = vadd.f32 %v714, %v726
  %v731 = vadd.f32 %v715, %v727
  %v732 = vadd.f32 %v716, %v728
  %v733 = vlaneseq
  %v734 = vshrl.u32 %v733, 7
  %v735 = vsub.s32 2, %v734
  %v736 = vrot.slane %v703, %v735
  %v737 = vlaneseq
  %v738 = vshrl.u32 %v737, 7
  %v739 = vsub.s32 2, %v738
  %v740 = vrot.slane %v704, %v739
  %v741 = vmul.f32 %v736, %v18
  %v742 = vmul.f32 %v736, %v19
  %v743 = vmul.f32 %v740, %v18
  %v744 = vmul.f32 %v740, %v19
  %v745 = vadd.f32 %v729, %v741
  %v746 = vadd.f32 %v730, %v742
  %v747 = vadd.f32 %v731, %v743
  %v748 = vadd.f32 %v732, %v744
  %v749 = vlaneseq
  %v750 = vshrl.u32 %v749, 7
  %v751 = vsub.s32 3, %v750
  %v752 = vrot.slane %v703, %v751
  %v753 = vlaneseq
  %v754 = vshrl.u32 %v753, 7
  %v755 = vsub.s32 3, %v754
  %v756 = vrot.slane %v704, %v755
  %v757 = vmul.f32 %v752, %v20
  %v758 = vmul.f32 %v752, %v21
  %v759 = vmul.f32 %v756, %v20
  %v760 = vmul.f32 %v756, %v21
  %v761 = vadd.f32 %v745, %v757
  %v762 = vadd.f32 %v746, %v758
  %v763 = vadd.f32 %v747, %v759
  %v764 = vadd.f32 %v748, %v760
  %v765 = vlaneseq
  %v766 = vshrl.u32 %v765, 7
  %v767 = vsub.s32 4, %v766
  %v768 = vrot.slane %v703, %v767
  %v769 = vlaneseq
  %v770 = vshrl.u32 %v769, 7
  %v771 = vsub.s32 4, %v770
  %v772 = vrot.slane %v704, %v771
  %v773 = vmul.f32 %v768, %v22
  %v774 = vmul.f32 %v768, %v23
  %v775 = vmul.f32 %v772, %v22
  %v776 = vmul.f32 %v772, %v23
  %v777 = vadd.f32 %v761, %v773
  %v778 = vadd.f32 %v762, %v774
  %v779 = vadd.f32 %v763, %v775
  %v780 = vadd.f32 %v764, %v776
  %v781 = vlaneseq
  %v782 = vshrl.u32 %v781, 7
  %v783 = vsub.s32 5, %v782
  %v784 = vrot.slane %v703, %v783
  %v785 = vlaneseq
  %v786 = vshrl.u32 %v785, 7
  %v787 = vsub.s32 5, %v786
  %v788 = vrot.slane %v704, %v787
  %v789 = vmul.f32 %v784, %v24
  %v790 = vmul.f32 %v784, %v25
  %v791 = vmul.f32 %v788, %v24
  %v792 = vmul.f32 %v788, %v25
  %v793 = vadd.f32 %v777, %v789
  %v794 = vadd.f32 %v778, %v790
  %v795 = vadd.f32 %v779, %v791
  %v796 = vadd.f32 %v780, %v792
  %v797 = vlaneseq
  %v798 = vshrl.u32 %v797, 7
  %v799 = vsub.s32 6, %v798
  %v800 = vrot.slane %v703, %v799
  %v801 = vlaneseq
  %v802 = vshrl.u32 %v801, 7
  %v803 = vsub.s32 6, %v802
  %v804 = vrot.slane %v704, %v803
  %v805 = vmul.f32 %v800, %v26
  %v806 = vmul.f32 %v800, %v27
  %v807 = vmul.f32 %v804, %v26
  %v808 = vmul.f32 %v804, %v27
  %v809 = vadd.f32 %v793, %v805
  %v810 = vadd.f32 %v794, %v806
  %v811 = vadd.f32 %v795, %v807
  %v812 = vadd.f32 %v796, %v808
  %v813 = vlaneseq
  %v814 = vshrl.u32 %v813, 7
  %v815 = vsub.s32 7, %v814
  %v816 = vrot.slane %v703, %v815
  %v817 = vlaneseq
  %v818 = vshrl.u32 %v817, 7
  %v819 = vsub.s32 7, %v818
  %v820 = vrot.slane %v704, %v819
  %v821 = vmul.f32 %v816, %v28
  %v822 = vmul.f32 %v816, %v29
  %v823 = vmul.f32 %v820, %v28
  %v824 = vmul.f32 %v820, %v29
  %v825 = vadd.f32 %v809, %v821
  %v826 = vadd.f32 %v810, %v822
  %v827 = vadd.f32 %v811, %v823
  %v828 = vadd.f32 %v812, %v824
  %s829 = scalar_lea.vmem %s0, 48
  %v830 = vld [vmem:[%s829] sm:$0xff]
  %v831 = vld [vmem:[%s829 + $0x8] sm:$0xff]
  %v832 = vsub.f32 %v826, %v830
  %v833 = vsub.f32 %v828, %v831
  %v834 = vmul.f32 %v832, %v832
  %v835 = vmul.f32 %v833, %v833
  %v836 = vrot.slane %v834, 4
  %v837 = vadd.f32 %v834, %v836
  %v838 = vrot.slane %v837, 2
  %v839 = vadd.f32 %v837, %v838
  %v840 = vrot.slane %v839, 1
  %v841 = vadd.f32 %v839, %v840
  %v842 = vrot.slane %v835, 4
  %v843 = vadd.f32 %v835, %v842
  %v844 = vrot.slane %v843, 2
  %v845 = vadd.f32 %v843, %v844
  %v846 = vrot.slane %v845, 1
  %v847 = vadd.f32 %v845, %v846
  %v848 = vmul.f32 %v841, -0.25
  %v849 = vmul.f32 %v847, -0.25
  %v850 = vadd.f32 %v848, -10.124097
  %v851 = vadd.f32 %v849, -10.124097
  %v852 = vadd.f32 %v663, %v850
  %v853 = vadd.f32 %v664, %v851
  %v856 = vrot.slane %v853, 7
  %v857 = vsel %vm180, %v856, %v852
  %v859 = vsel %vm183, %v857, -inf
  %860 = vmax.xlane.f32.xlu0 %v859
  %v861 = vpop.xlane.xlu0 %860
  %v863 = vrot.slane %v861, 1
  %v866 = vsub.f32 %v852, %v861
  %v867 = vsub.f32 %v853, %v863
  %v868 = vmul.f32 %v866, 1.442695
  %v869 = vpow.pop %v868
  %v870 = vmul.f32 %v867, 1.442695
  %v871 = vpow.pop %v870
  %v874 = vrot.slane %v871, 7
  %v875 = vsel %vm180, %v874, %v869
  %v877 = vsel %vm183, %v875, 0.0
  %878 = vadd.xlane.f32.xlu0 %v877
  %v879 = vpop.xlane.xlu0 %878
  %v880 = vlog2.pop %v879
  %v881 = vmul.f32 %v880, 0.6931472
  %v882 = vadd.f32 %v861, %v881
  %v884 = vrot.slane %v882, 1
  %v887 = vsub.f32 %v852, %v882
  %v888 = vsub.f32 %v853, %v884
  %v889 = vmul.f32 %v887, 1.442695
  %v890 = vpow.pop %v889
  %v891 = vmul.f32 %v888, 1.442695
  %v892 = vpow.pop %v891
  %v893 = vlaneseq
  %v894 = vshrl.u32 %v893, 7
  %v895 = vsub.s32 0, %v894
  %v896 = vrot.slane %v890, %v895
  %v897 = vlaneseq
  %v898 = vshrl.u32 %v897, 7
  %v899 = vsub.s32 0, %v898
  %v900 = vrot.slane %v892, %v899
  %v901 = vmul.f32 %v896, %v703
  %v902 = vmul.f32 %v900, %v704
  %903 = vadd.xlane.f32.xlu0 %v901
  %v904 = vpop.xlane.xlu0 %903
  %905 = vadd.xlane.f32.xlu0 %v902
  %v906 = vpop.xlane.xlu0 %905
  %v907 = vsub.f32 %v882, 4.8520303
  %v910 = vlaneseq
  %v911 = vshrl.u32 %v910, 7
  %v912 = vsub.s32 %v236, %v911
  %v913 = vrot.slane %v904, %v912
  %v914 = vlaneseq
  %v915 = vshrl.u32 %v914, 7
  %v916 = vsub.s32 %v236, %v915
  %v917 = vrot.slane %v906, %v916
  %v918 = vsel %vm180, %v917, %v913
  %v920 = vsel %vm247, %v918, %v907
  %v921 = vsel %vm249, %v920, 0.0
  %s922 = scalar_lea.vmem %s3, 6
  %923 = vst [vmem:[%s922] sm:$0x3] %v921
  %s924 = scalar_lea.vmem %s1, 64
  %v925 = vld [vmem:[%s924] sm:$0xff]
  %v926 = vld [vmem:[%s924 + $0x8] sm:$0xff]
  %v927 = vadd.f32 %v825, %v925
  %v928 = vadd.f32 %v827, %v926
  %v929 = vlaneseq
  %v930 = vshrl.u32 %v929, 7
  %v931 = vsub.s32 0, %v930
  %v932 = vrot.slane %v927, %v931
  %v933 = vlaneseq
  %v934 = vshrl.u32 %v933, 7
  %v935 = vsub.s32 0, %v934
  %v936 = vrot.slane %v928, %v935
  %v937 = vmul.f32 %v932, %v14
  %v938 = vmul.f32 %v932, %v15
  %v939 = vmul.f32 %v936, %v14
  %v940 = vmul.f32 %v936, %v15
  %v941 = vlaneseq
  %v942 = vshrl.u32 %v941, 7
  %v943 = vsub.s32 1, %v942
  %v944 = vrot.slane %v927, %v943
  %v945 = vlaneseq
  %v946 = vshrl.u32 %v945, 7
  %v947 = vsub.s32 1, %v946
  %v948 = vrot.slane %v928, %v947
  %v949 = vmul.f32 %v944, %v16
  %v950 = vmul.f32 %v944, %v17
  %v951 = vmul.f32 %v948, %v16
  %v952 = vmul.f32 %v948, %v17
  %v953 = vadd.f32 %v937, %v949
  %v954 = vadd.f32 %v938, %v950
  %v955 = vadd.f32 %v939, %v951
  %v956 = vadd.f32 %v940, %v952
  %v957 = vlaneseq
  %v958 = vshrl.u32 %v957, 7
  %v959 = vsub.s32 2, %v958
  %v960 = vrot.slane %v927, %v959
  %v961 = vlaneseq
  %v962 = vshrl.u32 %v961, 7
  %v963 = vsub.s32 2, %v962
  %v964 = vrot.slane %v928, %v963
  %v965 = vmul.f32 %v960, %v18
  %v966 = vmul.f32 %v960, %v19
  %v967 = vmul.f32 %v964, %v18
  %v968 = vmul.f32 %v964, %v19
  %v969 = vadd.f32 %v953, %v965
  %v970 = vadd.f32 %v954, %v966
  %v971 = vadd.f32 %v955, %v967
  %v972 = vadd.f32 %v956, %v968
  %v973 = vlaneseq
  %v974 = vshrl.u32 %v973, 7
  %v975 = vsub.s32 3, %v974
  %v976 = vrot.slane %v927, %v975
  %v977 = vlaneseq
  %v978 = vshrl.u32 %v977, 7
  %v979 = vsub.s32 3, %v978
  %v980 = vrot.slane %v928, %v979
  %v981 = vmul.f32 %v976, %v20
  %v982 = vmul.f32 %v976, %v21
  %v983 = vmul.f32 %v980, %v20
  %v984 = vmul.f32 %v980, %v21
  %v985 = vadd.f32 %v969, %v981
  %v986 = vadd.f32 %v970, %v982
  %v987 = vadd.f32 %v971, %v983
  %v988 = vadd.f32 %v972, %v984
  %v989 = vlaneseq
  %v990 = vshrl.u32 %v989, 7
  %v991 = vsub.s32 4, %v990
  %v992 = vrot.slane %v927, %v991
  %v993 = vlaneseq
  %v994 = vshrl.u32 %v993, 7
  %v995 = vsub.s32 4, %v994
  %v996 = vrot.slane %v928, %v995
  %v997 = vmul.f32 %v992, %v22
  %v998 = vmul.f32 %v992, %v23
  %v999 = vmul.f32 %v996, %v22
  %v1000 = vmul.f32 %v996, %v23
  %v1001 = vadd.f32 %v985, %v997
  %v1002 = vadd.f32 %v986, %v998
  %v1003 = vadd.f32 %v987, %v999
  %v1004 = vadd.f32 %v988, %v1000
  %v1005 = vlaneseq
  %v1006 = vshrl.u32 %v1005, 7
  %v1007 = vsub.s32 5, %v1006
  %v1008 = vrot.slane %v927, %v1007
  %v1009 = vlaneseq
  %v1010 = vshrl.u32 %v1009, 7
  %v1011 = vsub.s32 5, %v1010
  %v1012 = vrot.slane %v928, %v1011
  %v1013 = vmul.f32 %v1008, %v24
  %v1014 = vmul.f32 %v1008, %v25
  %v1015 = vmul.f32 %v1012, %v24
  %v1016 = vmul.f32 %v1012, %v25
  %v1017 = vadd.f32 %v1001, %v1013
  %v1018 = vadd.f32 %v1002, %v1014
  %v1019 = vadd.f32 %v1003, %v1015
  %v1020 = vadd.f32 %v1004, %v1016
  %v1021 = vlaneseq
  %v1022 = vshrl.u32 %v1021, 7
  %v1023 = vsub.s32 6, %v1022
  %v1024 = vrot.slane %v927, %v1023
  %v1025 = vlaneseq
  %v1026 = vshrl.u32 %v1025, 7
  %v1027 = vsub.s32 6, %v1026
  %v1028 = vrot.slane %v928, %v1027
  %v1029 = vmul.f32 %v1024, %v26
  %v1030 = vmul.f32 %v1024, %v27
  %v1031 = vmul.f32 %v1028, %v26
  %v1032 = vmul.f32 %v1028, %v27
  %v1033 = vadd.f32 %v1017, %v1029
  %v1034 = vadd.f32 %v1018, %v1030
  %v1035 = vadd.f32 %v1019, %v1031
  %v1036 = vadd.f32 %v1020, %v1032
  %v1037 = vlaneseq
  %v1038 = vshrl.u32 %v1037, 7
  %v1039 = vsub.s32 7, %v1038
  %v1040 = vrot.slane %v927, %v1039
  %v1041 = vlaneseq
  %v1042 = vshrl.u32 %v1041, 7
  %v1043 = vsub.s32 7, %v1042
  %v1044 = vrot.slane %v928, %v1043
  %v1045 = vmul.f32 %v1040, %v28
  %v1046 = vmul.f32 %v1040, %v29
  %v1047 = vmul.f32 %v1044, %v28
  %v1048 = vmul.f32 %v1044, %v29
  %v1049 = vadd.f32 %v1033, %v1045
  %v1050 = vadd.f32 %v1034, %v1046
  %v1051 = vadd.f32 %v1035, %v1047
  %v1052 = vadd.f32 %v1036, %v1048
  %s1053 = scalar_lea.vmem %s0, 64
  %v1054 = vld [vmem:[%s1053] sm:$0xff]
  %v1055 = vld [vmem:[%s1053 + $0x8] sm:$0xff]
  %v1056 = vsub.f32 %v1050, %v1054
  %v1057 = vsub.f32 %v1052, %v1055
  %v1058 = vmul.f32 %v1056, %v1056
  %v1059 = vmul.f32 %v1057, %v1057
  %v1060 = vrot.slane %v1058, 4
  %v1061 = vadd.f32 %v1058, %v1060
  %v1062 = vrot.slane %v1061, 2
  %v1063 = vadd.f32 %v1061, %v1062
  %v1064 = vrot.slane %v1063, 1
  %v1065 = vadd.f32 %v1063, %v1064
  %v1066 = vrot.slane %v1059, 4
  %v1067 = vadd.f32 %v1059, %v1066
  %v1068 = vrot.slane %v1067, 2
  %v1069 = vadd.f32 %v1067, %v1068
  %v1070 = vrot.slane %v1069, 1
  %v1071 = vadd.f32 %v1069, %v1070
  %v1072 = vmul.f32 %v1065, -0.25
  %v1073 = vmul.f32 %v1071, -0.25
  %v1074 = vadd.f32 %v1072, -10.124097
  %v1075 = vadd.f32 %v1073, -10.124097
  %v1076 = vadd.f32 %v887, %v1074
  %v1077 = vadd.f32 %v888, %v1075
  %v1080 = vrot.slane %v1077, 7
  %v1081 = vsel %vm180, %v1080, %v1076
  %v1083 = vsel %vm183, %v1081, -inf
  %1084 = vmax.xlane.f32.xlu0 %v1083
  %v1085 = vpop.xlane.xlu0 %1084
  %v1087 = vrot.slane %v1085, 1
  %v1090 = vsub.f32 %v1076, %v1085
  %v1091 = vsub.f32 %v1077, %v1087
  %v1092 = vmul.f32 %v1090, 1.442695
  %v1093 = vpow.pop %v1092
  %v1094 = vmul.f32 %v1091, 1.442695
  %v1095 = vpow.pop %v1094
  %v1098 = vrot.slane %v1095, 7
  %v1099 = vsel %vm180, %v1098, %v1093
  %v1101 = vsel %vm183, %v1099, 0.0
  %1102 = vadd.xlane.f32.xlu0 %v1101
  %v1103 = vpop.xlane.xlu0 %1102
  %v1104 = vlog2.pop %v1103
  %v1105 = vmul.f32 %v1104, 0.6931472
  %v1106 = vadd.f32 %v1085, %v1105
  %v1108 = vrot.slane %v1106, 1
  %v1111 = vsub.f32 %v1076, %v1106
  %v1112 = vsub.f32 %v1077, %v1108
  %v1113 = vmul.f32 %v1111, 1.442695
  %v1114 = vpow.pop %v1113
  %v1115 = vmul.f32 %v1112, 1.442695
  %v1116 = vpow.pop %v1115
  %v1117 = vlaneseq
  %v1118 = vshrl.u32 %v1117, 7
  %v1119 = vsub.s32 0, %v1118
  %v1120 = vrot.slane %v1114, %v1119
  %v1121 = vlaneseq
  %v1122 = vshrl.u32 %v1121, 7
  %v1123 = vsub.s32 0, %v1122
  %v1124 = vrot.slane %v1116, %v1123
  %v1125 = vmul.f32 %v1120, %v927
  %v1126 = vmul.f32 %v1124, %v928
  %1127 = vadd.xlane.f32.xlu0 %v1125
  %v1128 = vpop.xlane.xlu0 %1127
  %1129 = vadd.xlane.f32.xlu0 %v1126
  %v1130 = vpop.xlane.xlu0 %1129
  %v1131 = vsub.f32 %v1106, 4.8520303
  %v1134 = vlaneseq
  %v1135 = vshrl.u32 %v1134, 7
  %v1136 = vsub.s32 %v236, %v1135
  %v1137 = vrot.slane %v1128, %v1136
  %v1138 = vlaneseq
  %v1139 = vshrl.u32 %v1138, 7
  %v1140 = vsub.s32 %v236, %v1139
  %v1141 = vrot.slane %v1130, %v1140
  %v1142 = vsel %vm180, %v1141, %v1137
  %v1144 = vsel %vm247, %v1142, %v1131
  %v1145 = vsel %vm249, %v1144, 0.0
  %s1146 = scalar_lea.vmem %s3, 8
  %1147 = vst [vmem:[%s1146] sm:$0x3] %v1145
  %s1148 = scalar_lea.vmem %s1, 80
  %v1149 = vld [vmem:[%s1148] sm:$0xff]
  %v1150 = vld [vmem:[%s1148 + $0x8] sm:$0xff]
  %v1151 = vadd.f32 %v1049, %v1149
  %v1152 = vadd.f32 %v1051, %v1150
  %v1153 = vlaneseq
  %v1154 = vshrl.u32 %v1153, 7
  %v1155 = vsub.s32 0, %v1154
  %v1156 = vrot.slane %v1151, %v1155
  %v1157 = vlaneseq
  %v1158 = vshrl.u32 %v1157, 7
  %v1159 = vsub.s32 0, %v1158
  %v1160 = vrot.slane %v1152, %v1159
  %v1161 = vmul.f32 %v1156, %v14
  %v1162 = vmul.f32 %v1156, %v15
  %v1163 = vmul.f32 %v1160, %v14
  %v1164 = vmul.f32 %v1160, %v15
  %v1165 = vlaneseq
  %v1166 = vshrl.u32 %v1165, 7
  %v1167 = vsub.s32 1, %v1166
  %v1168 = vrot.slane %v1151, %v1167
  %v1169 = vlaneseq
  %v1170 = vshrl.u32 %v1169, 7
  %v1171 = vsub.s32 1, %v1170
  %v1172 = vrot.slane %v1152, %v1171
  %v1173 = vmul.f32 %v1168, %v16
  %v1174 = vmul.f32 %v1168, %v17
  %v1175 = vmul.f32 %v1172, %v16
  %v1176 = vmul.f32 %v1172, %v17
  %v1177 = vadd.f32 %v1161, %v1173
  %v1178 = vadd.f32 %v1162, %v1174
  %v1179 = vadd.f32 %v1163, %v1175
  %v1180 = vadd.f32 %v1164, %v1176
  %v1181 = vlaneseq
  %v1182 = vshrl.u32 %v1181, 7
  %v1183 = vsub.s32 2, %v1182
  %v1184 = vrot.slane %v1151, %v1183
  %v1185 = vlaneseq
  %v1186 = vshrl.u32 %v1185, 7
  %v1187 = vsub.s32 2, %v1186
  %v1188 = vrot.slane %v1152, %v1187
  %v1189 = vmul.f32 %v1184, %v18
  %v1190 = vmul.f32 %v1184, %v19
  %v1191 = vmul.f32 %v1188, %v18
  %v1192 = vmul.f32 %v1188, %v19
  %v1193 = vadd.f32 %v1177, %v1189
  %v1194 = vadd.f32 %v1178, %v1190
  %v1195 = vadd.f32 %v1179, %v1191
  %v1196 = vadd.f32 %v1180, %v1192
  %v1197 = vlaneseq
  %v1198 = vshrl.u32 %v1197, 7
  %v1199 = vsub.s32 3, %v1198
  %v1200 = vrot.slane %v1151, %v1199
  %v1201 = vlaneseq
  %v1202 = vshrl.u32 %v1201, 7
  %v1203 = vsub.s32 3, %v1202
  %v1204 = vrot.slane %v1152, %v1203
  %v1205 = vmul.f32 %v1200, %v20
  %v1206 = vmul.f32 %v1200, %v21
  %v1207 = vmul.f32 %v1204, %v20
  %v1208 = vmul.f32 %v1204, %v21
  %v1209 = vadd.f32 %v1193, %v1205
  %v1210 = vadd.f32 %v1194, %v1206
  %v1211 = vadd.f32 %v1195, %v1207
  %v1212 = vadd.f32 %v1196, %v1208
  %v1213 = vlaneseq
  %v1214 = vshrl.u32 %v1213, 7
  %v1215 = vsub.s32 4, %v1214
  %v1216 = vrot.slane %v1151, %v1215
  %v1217 = vlaneseq
  %v1218 = vshrl.u32 %v1217, 7
  %v1219 = vsub.s32 4, %v1218
  %v1220 = vrot.slane %v1152, %v1219
  %v1221 = vmul.f32 %v1216, %v22
  %v1222 = vmul.f32 %v1216, %v23
  %v1223 = vmul.f32 %v1220, %v22
  %v1224 = vmul.f32 %v1220, %v23
  %v1225 = vadd.f32 %v1209, %v1221
  %v1226 = vadd.f32 %v1210, %v1222
  %v1227 = vadd.f32 %v1211, %v1223
  %v1228 = vadd.f32 %v1212, %v1224
  %v1229 = vlaneseq
  %v1230 = vshrl.u32 %v1229, 7
  %v1231 = vsub.s32 5, %v1230
  %v1232 = vrot.slane %v1151, %v1231
  %v1233 = vlaneseq
  %v1234 = vshrl.u32 %v1233, 7
  %v1235 = vsub.s32 5, %v1234
  %v1236 = vrot.slane %v1152, %v1235
  %v1237 = vmul.f32 %v1232, %v24
  %v1238 = vmul.f32 %v1232, %v25
  %v1239 = vmul.f32 %v1236, %v24
  %v1240 = vmul.f32 %v1236, %v25
  %v1241 = vadd.f32 %v1225, %v1237
  %v1242 = vadd.f32 %v1226, %v1238
  %v1243 = vadd.f32 %v1227, %v1239
  %v1244 = vadd.f32 %v1228, %v1240
  %v1245 = vlaneseq
  %v1246 = vshrl.u32 %v1245, 7
  %v1247 = vsub.s32 6, %v1246
  %v1248 = vrot.slane %v1151, %v1247
  %v1249 = vlaneseq
  %v1250 = vshrl.u32 %v1249, 7
  %v1251 = vsub.s32 6, %v1250
  %v1252 = vrot.slane %v1152, %v1251
  %v1253 = vmul.f32 %v1248, %v26
  %v1254 = vmul.f32 %v1248, %v27
  %v1255 = vmul.f32 %v1252, %v26
  %v1256 = vmul.f32 %v1252, %v27
  %v1257 = vadd.f32 %v1241, %v1253
  %v1258 = vadd.f32 %v1242, %v1254
  %v1259 = vadd.f32 %v1243, %v1255
  %v1260 = vadd.f32 %v1244, %v1256
  %v1261 = vlaneseq
  %v1262 = vshrl.u32 %v1261, 7
  %v1263 = vsub.s32 7, %v1262
  %v1264 = vrot.slane %v1151, %v1263
  %v1265 = vlaneseq
  %v1266 = vshrl.u32 %v1265, 7
  %v1267 = vsub.s32 7, %v1266
  %v1268 = vrot.slane %v1152, %v1267
  %v1269 = vmul.f32 %v1264, %v28
  %v1270 = vmul.f32 %v1264, %v29
  %v1271 = vmul.f32 %v1268, %v28
  %v1272 = vmul.f32 %v1268, %v29
  %v1273 = vadd.f32 %v1257, %v1269
  %v1274 = vadd.f32 %v1258, %v1270
  %v1275 = vadd.f32 %v1259, %v1271
  %v1276 = vadd.f32 %v1260, %v1272
  %s1277 = scalar_lea.vmem %s0, 80
  %v1278 = vld [vmem:[%s1277] sm:$0xff]
  %v1279 = vld [vmem:[%s1277 + $0x8] sm:$0xff]
  %v1280 = vsub.f32 %v1274, %v1278
  %v1281 = vsub.f32 %v1276, %v1279
  %v1282 = vmul.f32 %v1280, %v1280
  %v1283 = vmul.f32 %v1281, %v1281
  %v1284 = vrot.slane %v1282, 4
  %v1285 = vadd.f32 %v1282, %v1284
  %v1286 = vrot.slane %v1285, 2
  %v1287 = vadd.f32 %v1285, %v1286
  %v1288 = vrot.slane %v1287, 1
  %v1289 = vadd.f32 %v1287, %v1288
  %v1290 = vrot.slane %v1283, 4
  %v1291 = vadd.f32 %v1283, %v1290
  %v1292 = vrot.slane %v1291, 2
  %v1293 = vadd.f32 %v1291, %v1292
  %v1294 = vrot.slane %v1293, 1
  %v1295 = vadd.f32 %v1293, %v1294
  %v1296 = vmul.f32 %v1289, -0.25
  %v1297 = vmul.f32 %v1295, -0.25
  %v1298 = vadd.f32 %v1296, -10.124097
  %v1299 = vadd.f32 %v1297, -10.124097
  %v1300 = vadd.f32 %v1111, %v1298
  %v1301 = vadd.f32 %v1112, %v1299
  %v1304 = vrot.slane %v1301, 7
  %v1305 = vsel %vm180, %v1304, %v1300
  %v1307 = vsel %vm183, %v1305, -inf
  %1308 = vmax.xlane.f32.xlu0 %v1307
  %v1309 = vpop.xlane.xlu0 %1308
  %v1311 = vrot.slane %v1309, 1
  %v1314 = vsub.f32 %v1300, %v1309
  %v1315 = vsub.f32 %v1301, %v1311
  %v1316 = vmul.f32 %v1314, 1.442695
  %v1317 = vpow.pop %v1316
  %v1318 = vmul.f32 %v1315, 1.442695
  %v1319 = vpow.pop %v1318
  %v1322 = vrot.slane %v1319, 7
  %v1323 = vsel %vm180, %v1322, %v1317
  %v1325 = vsel %vm183, %v1323, 0.0
  %1326 = vadd.xlane.f32.xlu0 %v1325
  %v1327 = vpop.xlane.xlu0 %1326
  %v1328 = vlog2.pop %v1327
  %v1329 = vmul.f32 %v1328, 0.6931472
  %v1330 = vadd.f32 %v1309, %v1329
  %v1332 = vrot.slane %v1330, 1
  %v1335 = vsub.f32 %v1300, %v1330
  %v1336 = vsub.f32 %v1301, %v1332
  %v1337 = vmul.f32 %v1335, 1.442695
  %v1338 = vpow.pop %v1337
  %v1339 = vmul.f32 %v1336, 1.442695
  %v1340 = vpow.pop %v1339
  %v1341 = vlaneseq
  %v1342 = vshrl.u32 %v1341, 7
  %v1343 = vsub.s32 0, %v1342
  %v1344 = vrot.slane %v1338, %v1343
  %v1345 = vlaneseq
  %v1346 = vshrl.u32 %v1345, 7
  %v1347 = vsub.s32 0, %v1346
  %v1348 = vrot.slane %v1340, %v1347
  %v1349 = vmul.f32 %v1344, %v1151
  %v1350 = vmul.f32 %v1348, %v1152
  %1351 = vadd.xlane.f32.xlu0 %v1349
  %v1352 = vpop.xlane.xlu0 %1351
  %1353 = vadd.xlane.f32.xlu0 %v1350
  %v1354 = vpop.xlane.xlu0 %1353
  %v1355 = vsub.f32 %v1330, 4.8520303
  %v1358 = vlaneseq
  %v1359 = vshrl.u32 %v1358, 7
  %v1360 = vsub.s32 %v236, %v1359
  %v1361 = vrot.slane %v1352, %v1360
  %v1362 = vlaneseq
  %v1363 = vshrl.u32 %v1362, 7
  %v1364 = vsub.s32 %v236, %v1363
  %v1365 = vrot.slane %v1354, %v1364
  %v1366 = vsel %vm180, %v1365, %v1361
  %v1368 = vsel %vm247, %v1366, %v1355
  %v1369 = vsel %vm249, %v1368, 0.0
  %s1370 = scalar_lea.vmem %s3, 10
  %1371 = vst [vmem:[%s1370] sm:$0x3] %v1369
  %s1372 = scalar_lea.vmem %s1, 96
  %v1373 = vld [vmem:[%s1372] sm:$0xff]
  %v1374 = vld [vmem:[%s1372 + $0x8] sm:$0xff]
  %v1375 = vadd.f32 %v1273, %v1373
  %v1376 = vadd.f32 %v1275, %v1374
  %v1377 = vlaneseq
  %v1378 = vshrl.u32 %v1377, 7
  %v1379 = vsub.s32 0, %v1378
  %v1380 = vrot.slane %v1375, %v1379
  %v1381 = vlaneseq
  %v1382 = vshrl.u32 %v1381, 7
  %v1383 = vsub.s32 0, %v1382
  %v1384 = vrot.slane %v1376, %v1383
  %v1385 = vmul.f32 %v1380, %v14
  %v1386 = vmul.f32 %v1380, %v15
  %v1387 = vmul.f32 %v1384, %v14
  %v1388 = vmul.f32 %v1384, %v15
  %v1389 = vlaneseq
  %v1390 = vshrl.u32 %v1389, 7
  %v1391 = vsub.s32 1, %v1390
  %v1392 = vrot.slane %v1375, %v1391
  %v1393 = vlaneseq
  %v1394 = vshrl.u32 %v1393, 7
  %v1395 = vsub.s32 1, %v1394
  %v1396 = vrot.slane %v1376, %v1395
  %v1397 = vmul.f32 %v1392, %v16
  %v1398 = vmul.f32 %v1392, %v17
  %v1399 = vmul.f32 %v1396, %v16
  %v1400 = vmul.f32 %v1396, %v17
  %v1401 = vadd.f32 %v1385, %v1397
  %v1402 = vadd.f32 %v1386, %v1398
  %v1403 = vadd.f32 %v1387, %v1399
  %v1404 = vadd.f32 %v1388, %v1400
  %v1405 = vlaneseq
  %v1406 = vshrl.u32 %v1405, 7
  %v1407 = vsub.s32 2, %v1406
  %v1408 = vrot.slane %v1375, %v1407
  %v1409 = vlaneseq
  %v1410 = vshrl.u32 %v1409, 7
  %v1411 = vsub.s32 2, %v1410
  %v1412 = vrot.slane %v1376, %v1411
  %v1413 = vmul.f32 %v1408, %v18
  %v1414 = vmul.f32 %v1408, %v19
  %v1415 = vmul.f32 %v1412, %v18
  %v1416 = vmul.f32 %v1412, %v19
  %v1417 = vadd.f32 %v1401, %v1413
  %v1418 = vadd.f32 %v1402, %v1414
  %v1419 = vadd.f32 %v1403, %v1415
  %v1420 = vadd.f32 %v1404, %v1416
  %v1421 = vlaneseq
  %v1422 = vshrl.u32 %v1421, 7
  %v1423 = vsub.s32 3, %v1422
  %v1424 = vrot.slane %v1375, %v1423
  %v1425 = vlaneseq
  %v1426 = vshrl.u32 %v1425, 7
  %v1427 = vsub.s32 3, %v1426
  %v1428 = vrot.slane %v1376, %v1427
  %v1429 = vmul.f32 %v1424, %v20
  %v1430 = vmul.f32 %v1424, %v21
  %v1431 = vmul.f32 %v1428, %v20
  %v1432 = vmul.f32 %v1428, %v21
  %v1433 = vadd.f32 %v1417, %v1429
  %v1434 = vadd.f32 %v1418, %v1430
  %v1435 = vadd.f32 %v1419, %v1431
  %v1436 = vadd.f32 %v1420, %v1432
  %v1437 = vlaneseq
  %v1438 = vshrl.u32 %v1437, 7
  %v1439 = vsub.s32 4, %v1438
  %v1440 = vrot.slane %v1375, %v1439
  %v1441 = vlaneseq
  %v1442 = vshrl.u32 %v1441, 7
  %v1443 = vsub.s32 4, %v1442
  %v1444 = vrot.slane %v1376, %v1443
  %v1445 = vmul.f32 %v1440, %v22
  %v1446 = vmul.f32 %v1440, %v23
  %v1447 = vmul.f32 %v1444, %v22
  %v1448 = vmul.f32 %v1444, %v23
  %v1449 = vadd.f32 %v1433, %v1445
  %v1450 = vadd.f32 %v1434, %v1446
  %v1451 = vadd.f32 %v1435, %v1447
  %v1452 = vadd.f32 %v1436, %v1448
  %v1453 = vlaneseq
  %v1454 = vshrl.u32 %v1453, 7
  %v1455 = vsub.s32 5, %v1454
  %v1456 = vrot.slane %v1375, %v1455
  %v1457 = vlaneseq
  %v1458 = vshrl.u32 %v1457, 7
  %v1459 = vsub.s32 5, %v1458
  %v1460 = vrot.slane %v1376, %v1459
  %v1461 = vmul.f32 %v1456, %v24
  %v1462 = vmul.f32 %v1456, %v25
  %v1463 = vmul.f32 %v1460, %v24
  %v1464 = vmul.f32 %v1460, %v25
  %v1465 = vadd.f32 %v1449, %v1461
  %v1466 = vadd.f32 %v1450, %v1462
  %v1467 = vadd.f32 %v1451, %v1463
  %v1468 = vadd.f32 %v1452, %v1464
  %v1469 = vlaneseq
  %v1470 = vshrl.u32 %v1469, 7
  %v1471 = vsub.s32 6, %v1470
  %v1472 = vrot.slane %v1375, %v1471
  %v1473 = vlaneseq
  %v1474 = vshrl.u32 %v1473, 7
  %v1475 = vsub.s32 6, %v1474
  %v1476 = vrot.slane %v1376, %v1475
  %v1477 = vmul.f32 %v1472, %v26
  %v1478 = vmul.f32 %v1472, %v27
  %v1479 = vmul.f32 %v1476, %v26
  %v1480 = vmul.f32 %v1476, %v27
  %v1481 = vadd.f32 %v1465, %v1477
  %v1482 = vadd.f32 %v1466, %v1478
  %v1483 = vadd.f32 %v1467, %v1479
  %v1484 = vadd.f32 %v1468, %v1480
  %v1485 = vlaneseq
  %v1486 = vshrl.u32 %v1485, 7
  %v1487 = vsub.s32 7, %v1486
  %v1488 = vrot.slane %v1375, %v1487
  %v1489 = vlaneseq
  %v1490 = vshrl.u32 %v1489, 7
  %v1491 = vsub.s32 7, %v1490
  %v1492 = vrot.slane %v1376, %v1491
  %v1493 = vmul.f32 %v1488, %v28
  %v1494 = vmul.f32 %v1488, %v29
  %v1495 = vmul.f32 %v1492, %v28
  %v1496 = vmul.f32 %v1492, %v29
  %v1497 = vadd.f32 %v1481, %v1493
  %v1498 = vadd.f32 %v1482, %v1494
  %v1499 = vadd.f32 %v1483, %v1495
  %v1500 = vadd.f32 %v1484, %v1496
  %s1501 = scalar_lea.vmem %s0, 96
  %v1502 = vld [vmem:[%s1501] sm:$0xff]
  %v1503 = vld [vmem:[%s1501 + $0x8] sm:$0xff]
  %v1504 = vsub.f32 %v1498, %v1502
  %v1505 = vsub.f32 %v1500, %v1503
  %v1506 = vmul.f32 %v1504, %v1504
  %v1507 = vmul.f32 %v1505, %v1505
  %v1508 = vrot.slane %v1506, 4
  %v1509 = vadd.f32 %v1506, %v1508
  %v1510 = vrot.slane %v1509, 2
  %v1511 = vadd.f32 %v1509, %v1510
  %v1512 = vrot.slane %v1511, 1
  %v1513 = vadd.f32 %v1511, %v1512
  %v1514 = vrot.slane %v1507, 4
  %v1515 = vadd.f32 %v1507, %v1514
  %v1516 = vrot.slane %v1515, 2
  %v1517 = vadd.f32 %v1515, %v1516
  %v1518 = vrot.slane %v1517, 1
  %v1519 = vadd.f32 %v1517, %v1518
  %v1520 = vmul.f32 %v1513, -0.25
  %v1521 = vmul.f32 %v1519, -0.25
  %v1522 = vadd.f32 %v1520, -10.124097
  %v1523 = vadd.f32 %v1521, -10.124097
  %v1524 = vadd.f32 %v1335, %v1522
  %v1525 = vadd.f32 %v1336, %v1523
  %v1528 = vrot.slane %v1525, 7
  %v1529 = vsel %vm180, %v1528, %v1524
  %v1531 = vsel %vm183, %v1529, -inf
  %1532 = vmax.xlane.f32.xlu0 %v1531
  %v1533 = vpop.xlane.xlu0 %1532
  %v1535 = vrot.slane %v1533, 1
  %v1538 = vsub.f32 %v1524, %v1533
  %v1539 = vsub.f32 %v1525, %v1535
  %v1540 = vmul.f32 %v1538, 1.442695
  %v1541 = vpow.pop %v1540
  %v1542 = vmul.f32 %v1539, 1.442695
  %v1543 = vpow.pop %v1542
  %v1546 = vrot.slane %v1543, 7
  %v1547 = vsel %vm180, %v1546, %v1541
  %v1549 = vsel %vm183, %v1547, 0.0
  %1550 = vadd.xlane.f32.xlu0 %v1549
  %v1551 = vpop.xlane.xlu0 %1550
  %v1552 = vlog2.pop %v1551
  %v1553 = vmul.f32 %v1552, 0.6931472
  %v1554 = vadd.f32 %v1533, %v1553
  %v1556 = vrot.slane %v1554, 1
  %v1559 = vsub.f32 %v1524, %v1554
  %v1560 = vsub.f32 %v1525, %v1556
  %v1561 = vmul.f32 %v1559, 1.442695
  %v1562 = vpow.pop %v1561
  %v1563 = vmul.f32 %v1560, 1.442695
  %v1564 = vpow.pop %v1563
  %v1565 = vlaneseq
  %v1566 = vshrl.u32 %v1565, 7
  %v1567 = vsub.s32 0, %v1566
  %v1568 = vrot.slane %v1562, %v1567
  %v1569 = vlaneseq
  %v1570 = vshrl.u32 %v1569, 7
  %v1571 = vsub.s32 0, %v1570
  %v1572 = vrot.slane %v1564, %v1571
  %v1573 = vmul.f32 %v1568, %v1375
  %v1574 = vmul.f32 %v1572, %v1376
  %1575 = vadd.xlane.f32.xlu0 %v1573
  %v1576 = vpop.xlane.xlu0 %1575
  %1577 = vadd.xlane.f32.xlu0 %v1574
  %v1578 = vpop.xlane.xlu0 %1577
  %v1579 = vsub.f32 %v1554, 4.8520303
  %v1582 = vlaneseq
  %v1583 = vshrl.u32 %v1582, 7
  %v1584 = vsub.s32 %v236, %v1583
  %v1585 = vrot.slane %v1576, %v1584
  %v1586 = vlaneseq
  %v1587 = vshrl.u32 %v1586, 7
  %v1588 = vsub.s32 %v236, %v1587
  %v1589 = vrot.slane %v1578, %v1588
  %v1590 = vsel %vm180, %v1589, %v1585
  %v1592 = vsel %vm247, %v1590, %v1579
  %v1593 = vsel %vm249, %v1592, 0.0
  %s1594 = scalar_lea.vmem %s3, 12
  %1595 = vst [vmem:[%s1594] sm:$0x3] %v1593
  %s1596 = scalar_lea.vmem %s1, 112
  %v1597 = vld [vmem:[%s1596] sm:$0xff]
  %v1598 = vld [vmem:[%s1596 + $0x8] sm:$0xff]
  %v1599 = vadd.f32 %v1497, %v1597
  %v1600 = vadd.f32 %v1499, %v1598
  %v1601 = vlaneseq
  %v1602 = vshrl.u32 %v1601, 7
  %v1603 = vsub.s32 0, %v1602
  %v1604 = vrot.slane %v1599, %v1603
  %v1605 = vlaneseq
  %v1606 = vshrl.u32 %v1605, 7
  %v1607 = vsub.s32 0, %v1606
  %v1608 = vrot.slane %v1600, %v1607
  %v1609 = vmul.f32 %v1604, %v15
  %v1610 = vmul.f32 %v1608, %v15
  %v1611 = vlaneseq
  %v1612 = vshrl.u32 %v1611, 7
  %v1613 = vsub.s32 1, %v1612
  %v1614 = vrot.slane %v1599, %v1613
  %v1615 = vlaneseq
  %v1616 = vshrl.u32 %v1615, 7
  %v1617 = vsub.s32 1, %v1616
  %v1618 = vrot.slane %v1600, %v1617
  %v1619 = vmul.f32 %v1614, %v17
  %v1620 = vmul.f32 %v1618, %v17
  %v1621 = vadd.f32 %v1609, %v1619
  %v1622 = vadd.f32 %v1610, %v1620
  %v1623 = vlaneseq
  %v1624 = vshrl.u32 %v1623, 7
  %v1625 = vsub.s32 2, %v1624
  %v1626 = vrot.slane %v1599, %v1625
  %v1627 = vlaneseq
  %v1628 = vshrl.u32 %v1627, 7
  %v1629 = vsub.s32 2, %v1628
  %v1630 = vrot.slane %v1600, %v1629
  %v1631 = vmul.f32 %v1626, %v19
  %v1632 = vmul.f32 %v1630, %v19
  %v1633 = vadd.f32 %v1621, %v1631
  %v1634 = vadd.f32 %v1622, %v1632
  %v1635 = vlaneseq
  %v1636 = vshrl.u32 %v1635, 7
  %v1637 = vsub.s32 3, %v1636
  %v1638 = vrot.slane %v1599, %v1637
  %v1639 = vlaneseq
  %v1640 = vshrl.u32 %v1639, 7
  %v1641 = vsub.s32 3, %v1640
  %v1642 = vrot.slane %v1600, %v1641
  %v1643 = vmul.f32 %v1638, %v21
  %v1644 = vmul.f32 %v1642, %v21
  %v1645 = vadd.f32 %v1633, %v1643
  %v1646 = vadd.f32 %v1634, %v1644
  %v1647 = vlaneseq
  %v1648 = vshrl.u32 %v1647, 7
  %v1649 = vsub.s32 4, %v1648
  %v1650 = vrot.slane %v1599, %v1649
  %v1651 = vlaneseq
  %v1652 = vshrl.u32 %v1651, 7
  %v1653 = vsub.s32 4, %v1652
  %v1654 = vrot.slane %v1600, %v1653
  %v1655 = vmul.f32 %v1650, %v23
  %v1656 = vmul.f32 %v1654, %v23
  %v1657 = vadd.f32 %v1645, %v1655
  %v1658 = vadd.f32 %v1646, %v1656
  %v1659 = vlaneseq
  %v1660 = vshrl.u32 %v1659, 7
  %v1661 = vsub.s32 5, %v1660
  %v1662 = vrot.slane %v1599, %v1661
  %v1663 = vlaneseq
  %v1664 = vshrl.u32 %v1663, 7
  %v1665 = vsub.s32 5, %v1664
  %v1666 = vrot.slane %v1600, %v1665
  %v1667 = vmul.f32 %v1662, %v25
  %v1668 = vmul.f32 %v1666, %v25
  %v1669 = vadd.f32 %v1657, %v1667
  %v1670 = vadd.f32 %v1658, %v1668
  %v1671 = vlaneseq
  %v1672 = vshrl.u32 %v1671, 7
  %v1673 = vsub.s32 6, %v1672
  %v1674 = vrot.slane %v1599, %v1673
  %v1675 = vlaneseq
  %v1676 = vshrl.u32 %v1675, 7
  %v1677 = vsub.s32 6, %v1676
  %v1678 = vrot.slane %v1600, %v1677
  %v1679 = vmul.f32 %v1674, %v27
  %v1680 = vmul.f32 %v1678, %v27
  %v1681 = vadd.f32 %v1669, %v1679
  %v1682 = vadd.f32 %v1670, %v1680
  %v1683 = vlaneseq
  %v1684 = vshrl.u32 %v1683, 7
  %v1685 = vsub.s32 7, %v1684
  %v1686 = vrot.slane %v1599, %v1685
  %v1687 = vlaneseq
  %v1688 = vshrl.u32 %v1687, 7
  %v1689 = vsub.s32 7, %v1688
  %v1690 = vrot.slane %v1600, %v1689
  %v1691 = vmul.f32 %v1686, %v29
  %v1692 = vmul.f32 %v1690, %v29
  %v1693 = vadd.f32 %v1681, %v1691
  %v1694 = vadd.f32 %v1682, %v1692
  %s1695 = scalar_lea.vmem %s0, 112
  %v1696 = vld [vmem:[%s1695] sm:$0xff]
  %v1697 = vld [vmem:[%s1695 + $0x8] sm:$0xff]
  %v1698 = vsub.f32 %v1693, %v1696
  %v1699 = vsub.f32 %v1694, %v1697
  %v1700 = vmul.f32 %v1698, %v1698
  %v1701 = vmul.f32 %v1699, %v1699
  %v1702 = vrot.slane %v1700, 4
  %v1703 = vadd.f32 %v1700, %v1702
  %v1704 = vrot.slane %v1703, 2
  %v1705 = vadd.f32 %v1703, %v1704
  %v1706 = vrot.slane %v1705, 1
  %v1707 = vadd.f32 %v1705, %v1706
  %v1708 = vrot.slane %v1701, 4
  %v1709 = vadd.f32 %v1701, %v1708
  %v1710 = vrot.slane %v1709, 2
  %v1711 = vadd.f32 %v1709, %v1710
  %v1712 = vrot.slane %v1711, 1
  %v1713 = vadd.f32 %v1711, %v1712
  %v1714 = vmul.f32 %v1707, -0.25
  %v1715 = vmul.f32 %v1713, -0.25
  %v1716 = vadd.f32 %v1714, -10.124097
  %v1717 = vadd.f32 %v1715, -10.124097
  %v1718 = vadd.f32 %v1559, %v1716
  %v1719 = vadd.f32 %v1560, %v1717
  %v1722 = vrot.slane %v1719, 7
  %v1723 = vsel %vm180, %v1722, %v1718
  %v1725 = vsel %vm183, %v1723, -inf
  %1726 = vmax.xlane.f32.xlu0 %v1725
  %v1727 = vpop.xlane.xlu0 %1726
  %v1729 = vrot.slane %v1727, 1
  %v1732 = vsub.f32 %v1718, %v1727
  %v1733 = vsub.f32 %v1719, %v1729
  %v1734 = vmul.f32 %v1732, 1.442695
  %v1735 = vpow.pop %v1734
  %v1736 = vmul.f32 %v1733, 1.442695
  %v1737 = vpow.pop %v1736
  %v1740 = vrot.slane %v1737, 7
  %v1741 = vsel %vm180, %v1740, %v1735
  %v1743 = vsel %vm183, %v1741, 0.0
  %1744 = vadd.xlane.f32.xlu0 %v1743
  %v1745 = vpop.xlane.xlu0 %1744
  %v1746 = vlog2.pop %v1745
  %v1747 = vmul.f32 %v1746, 0.6931472
  %v1748 = vadd.f32 %v1727, %v1747
  %v1750 = vrot.slane %v1748, 1
  %v1753 = vsub.f32 %v1718, %v1748
  %v1754 = vsub.f32 %v1719, %v1750
  %v1755 = vmul.f32 %v1753, 1.442695
  %v1756 = vpow.pop %v1755
  %v1757 = vmul.f32 %v1754, 1.442695
  %v1758 = vpow.pop %v1757
  %v1759 = vlaneseq
  %v1760 = vshrl.u32 %v1759, 7
  %v1761 = vsub.s32 0, %v1760
  %v1762 = vrot.slane %v1756, %v1761
  %v1763 = vlaneseq
  %v1764 = vshrl.u32 %v1763, 7
  %v1765 = vsub.s32 0, %v1764
  %v1766 = vrot.slane %v1758, %v1765
  %v1767 = vmul.f32 %v1762, %v1599
  %v1768 = vmul.f32 %v1766, %v1600
  %1769 = vadd.xlane.f32.xlu0 %v1767
  %v1770 = vpop.xlane.xlu0 %1769
  %1771 = vadd.xlane.f32.xlu0 %v1768
  %v1772 = vpop.xlane.xlu0 %1771
  %v1773 = vsub.f32 %v1748, 4.8520303
  %v1776 = vlaneseq
  %v1777 = vshrl.u32 %v1776, 7
  %v1778 = vsub.s32 %v236, %v1777
  %v1779 = vrot.slane %v1770, %v1778
  %v1780 = vlaneseq
  %v1781 = vshrl.u32 %v1780, 7
  %v1782 = vsub.s32 %v236, %v1781
  %v1783 = vrot.slane %v1772, %v1782
  %v1784 = vsel %vm180, %v1783, %v1779
  %v1786 = vsel %vm247, %v1784, %v1773
  %v1787 = vsel %vm249, %v1786, 0.0
  %s1788 = scalar_lea.vmem %s3, 14
  %1789 = vst [vmem:[%s1788] sm:$0x3] %v1787
  // Predicated region
  $region14: #{sis_filter.1} parent=0 // pred_check
    _
  $region15: #{sis_filter.1} parent=0 // pred_check_branch
    %1791 = sbr.rel (0) target = $region17
  $region16: #{sis_filter.1} parent=0 // pred_region
    _
  $region17: #{sis_filter.1} parent=0 // pred_fallthru
    _
  // Predicated region
  $region18: #{sis_filter.1} parent=0 // pred_check
    _
  $region19: #{sis_filter.1} parent=0 // pred_check_branch
    %1793 = sbr.rel (0) target = $region21
  $region20: #{sis_filter.1} parent=0 // pred_region
    _
  $region21: #{sis_filter.1} parent=0 // pred_fallthru
    _

</llo_original>
